<compile_context>
chip_gen: v7x
topology: tpu7x:2x2x1
jax: 0.10.0
libtpu: 0.0.40
codegen_flags: <defaults>
</compile_context>

<pallas_src>
import functools

import jax
import jax.numpy as jnp
from jax.experimental import pallas as pl
from jax.experimental.pallas import tpu as pltpu


# ----------------------------------------------------------------------------
# BlockSpec helper: whole array as a single block (everything fits VMEM easily;
# full-array blocks satisfy the (8,128) rule).
# ----------------------------------------------------------------------------
def _spec(shape):
    zeros = (0,) * len(shape)
    return pl.BlockSpec(shape, lambda i, _z=zeros: _z)


# ----------------------------------------------------------------------------
# Fused E_GCL kernel
# ----------------------------------------------------------------------------
def _egcl_fused_kernel(
    # data
    h_ref, coord_ref, ea_ref,
    g_row_ref, g_col_ref, s_row_ref,
    # edge_mlp  (W1 split into per-input K-blocks -> concat-free)
    w1_hr_ref, w1_hc_ref, w1_rad_ref, w1_ea_ref, b1_ref, w2_ref, b2_ref,
    # coord_mlp (final Linear(H,1,bias=False) stored as a [1,H] row vector)
    wc1_ref, bc1_ref, wc2_ref,
    # node_mlp  (W1 split into h / agg K-blocks)
    wn1_h_ref, wn1_a_ref, bn1_ref, wn2_ref, bn2_ref,
    # outputs
    h_out_ref, coord_out_ref,
    *, mxu_dtype,
):
    f32 = jnp.float32
    h = h_ref[...]            # [N, H]
    coord = coord_ref[...]    # [N, 3]

    g_row = g_row_ref[...]    # [E, N]  one-hot gather for edge source (row)
    g_col = g_col_ref[...]    # [E, N]  one-hot gather for edge target (col)
    s_row = s_row_ref[...]    # [N, E]  one-hot scatter (= g_row^T)

    def mm(a, w_ref):
        # bf16 MXU operands, f32 accumulation; elementwise stays f32.
        return jnp.dot(a.astype(mxu_dtype), w_ref[...].astype(mxu_dtype),
                       preferred_element_type=f32)

    # ---- in-kernel gathers (one-hot matmuls on the MXU) --------------------
    h_row = jnp.dot(g_row, h, preferred_element_type=f32)       # [E, H]
    h_col = jnp.dot(g_col, h, preferred_element_type=f32)       # [E, H]
    x_row = jnp.dot(g_row, coord, preferred_element_type=f32)   # [E, 3]
    x_col = jnp.dot(g_col, coord, preferred_element_type=f32)   # [E, 3]

    # ---- coord2radial -------------------------------------------------------
    coord_diff = x_row - x_col                                            # [E, 3]
    radial = jnp.sum(coord_diff * coord_diff, axis=-1, keepdims=True)     # [E, 1]

    # ---- edge model: SiLU(Lin) -> SiLU(Lin), concat-free --------------------
    m = mm(h_row, w1_hr_ref)
    m = m + mm(h_col, w1_hc_ref)
    m = m + mm(ea_ref[...], w1_ea_ref)
    # radial contribution is a rank-1 outer product -> do it on the VPU
    m = m + jnp.broadcast_to(radial, m.shape) * w1_rad_ref[...]
    m = jax.nn.silu(m + b1_ref[...])
    edge_feat = jax.nn.silu(mm(m, w2_ref) + b2_ref[...])                  # [E, H]

    # ---- coord model (mean aggregation) -------------------------------------
    hc = jax.nn.silu(mm(edge_feat, wc1_ref) + bc1_ref[...])               # [E, H]
    # Linear(H, 1, bias=False) as a lane reduce (avoids a lane-1 matmul)
    scale = jnp.sum(hc * wc2_ref[...], axis=-1, keepdims=True)            # [E, 1]
    trans = coord_diff * scale                                            # [E, 3]

    agg_c = jnp.dot(s_row, trans, preferred_element_type=f32)             # [N, 3]
    cnt = jnp.maximum(jnp.sum(s_row, axis=-1, keepdims=True), 1.0)        # [N, 1]
    coord_out_ref[...] = coord + agg_c * pl.reciprocal(cnt, approx=True)

    # ---- node model (sum aggregation) + residual -----------------------------
    agg_h = jnp.dot(s_row, edge_feat, preferred_element_type=f32)         # [N, H]
    n1 = jax.nn.silu(mm(h, wn1_h_ref) + mm(agg_h, wn1_a_ref) + bn1_ref[...])
    h_out_ref[...] = h + mm(n1, wn2_ref) + bn2_ref[...]


# ----------------------------------------------------------------------------
# Wrapper: builds the one-hot gather/scatter matrices (tiny XLA glue) and runs
# the fused kernel once.
# ----------------------------------------------------------------------------
def egcl_forward(params, h, edge_index, coord, edge_attr, mxu_dtype=jnp.bfloat16):
    N, H = h.shape
    E = edge_index.shape[1]
    D = edge_attr.shape[1]

    row = edge_index[0]
    col = edge_index[1]
    node_ids = jnp.arange(N, dtype=row.dtype)
    g_row = (row[:, None] == node_ids[None, :]).astype(jnp.float32)   # [E, N]
    g_col = (col[:, None] == node_ids[None, :]).astype(jnp.float32)   # [E, N]
    s_row = g_row.T                                                   # [N, E]

    inputs = (
        h, coord, edge_attr, g_row, g_col, s_row,
        params["e_w1_hr"], params["e_w1_hc"], params["e_w1_rad"], params["e_w1_ea"],
        params["e_b1"], params["e_w2"], params["e_b2"],
        params["c_w1"], params["c_b1"], params["c_w2"],
        params["n_w1_h"], params["n_w1_agg"], params["n_b1"],
        params["n_w2"], params["n_b2"],
    )

    # advisory cost estimate (flops/transcendentals/bytes are rough)
    flops = 2 * (E * N * (2 * H + 6)                 # gathers
                 + E * ((2 * H + D) * H + H * H)     # edge MLP
                 + E * (H * H + H)                   # coord MLP
                 + N * E * (H + 3)                   # scatters
                 + N * (3 * H * H))                  # node MLP
    transcendentals = 3 * E * H + N * H              # sigmoids inside SiLU
    bytes_accessed = sum(int(a.size) * a.dtype.itemsize for a in inputs) \
        + (N * H + N * 3) * 4

    h_out, coord_out = pl.pallas_call(
        functools.partial(_egcl_fused_kernel, mxu_dtype=mxu_dtype),
        grid=(1,),
        in_specs=[_spec(a.shape) for a in inputs],
        out_specs=(_spec((N, H)), _spec((N, 3))),
        out_shape=(jax.ShapeDtypeStruct((N, H), jnp.float32),
                   jax.ShapeDtypeStruct((N, 3), jnp.float32)),
        compiler_params=pltpu.CompilerParams(dimension_semantics=("arbitrary",)),
        cost_estimate=pl.CostEstimate(flops=flops,
                                      transcendentals=transcendentals,
                                      bytes_accessed=bytes_accessed),
    )(*inputs)
    return h_out, coord_out, edge_attr


# ----------------------------------------------------------------------------
# Pure-JAX reference (mirrors the PyTorch E_GCL forward, f32 throughout)
# ----------------------------------------------------------------------------
def egcl_reference(p, h, edge_index, coord, edge_attr):
    N = h.shape[0]
    row, col = edge_index[0], edge_index[1]
    coord_diff = coord[row] - coord[col]
    radial = jnp.sum(coord_diff ** 2, axis=1, keepdims=True)

    e_in = jnp.concatenate([h[row], h[col], radial, edge_attr], axis=1)
    w1 = jnp.concatenate([p["e_w1_hr"], p["e_w1_hc"], p["e_w1_rad"], p["e_w1_ea"]], axis=0)
    m = jax.nn.silu(e_in @ w1 + p["e_b1"])
    edge_feat = jax.nn.silu(m @ p["e_w2"] + p["e_b2"])

    hc = jax.nn.silu(edge_feat @ p["c_w1"] + p["c_b1"])
    scale = hc @ p["c_w2"].T                       # Linear(H, 1, bias=False)
    trans = coord_diff * scale
    agg_c = jnp.zeros((N, 3), jnp.float32).at[row].add(trans)
    cnt = jnp.zeros((N, 1), jnp.float32).at[row].add(jnp.ones((row.shape[0], 1)))
    coord_out = coord + agg_c / jnp.maximum(cnt, 1.0)

    agg_h = jnp.zeros((N, h.shape[1]), jnp.float32).at[row].add(edge_feat)
    wn1 = jnp.concatenate([p["n_w1_h"], p["n_w1_agg"]], axis=0)
    n1 = jax.nn.silu(jnp.concatenate([h, agg_h], axis=1) @ wn1 + p["n_b1"])
    h_out = h + (n1 @ p["n_w2"] + p["n_b2"])
    return h_out, coord_out


# ----------------------------------------------------------------------------
# Deterministic synthetic parameters (weights stored pre-split / pre-transposed
# so no concat and no transpose is needed inside the kernel)
# ----------------------------------------------------------------------------
def init_params(key, input_nf, hidden_nf, edges_in_d):
    H, D = hidden_nf, edges_in_d
    assert input_nf == H, "residual=True requires output_nf == input_nf (== hidden_nf here)"
    ks = jax.random.split(key, 12)

    def w(k, fi, fo, scale):
        return scale * jax.random.normal(k, (fi, fo), jnp.float32)

    def b(k, fo):
        return 0.1 * jax.random.normal(k, (1, fo), jnp.float32)

    edge_in = 2 * H + 1 + D
    s_e = 1.0 / float(edge_in) ** 0.5
    e_w1 = w(ks[0], edge_in, H, s_e)
    p = {
        "e_w1_hr": e_w1[:H], "e_w1_hc": e_w1[H:2 * H],
        "e_w1_rad": e_w1[2 * H:2 * H + 1], "e_w1_ea": e_w1[2 * H + 1:],
        "e_b1": b(ks[1], H),
        "e_w2": w(ks[2], H, H, 1.0 / float(H) ** 0.5), "e_b2": b(ks[3], H),
        "c_w1": w(ks[4], H, H, 1.0 / float(H) ** 0.5), "c_b1": b(ks[5], H),
        # coord_mlp final layer: Linear(H, 1, bias=False), xavier gain=0.001
        # (stored as a [1,H] row vector -> lane-reduce in kernel)
        "c_w2": 0.001 * jax.random.normal(ks[6], (1, H), jnp.float32),
        "n_b1": b(ks[8], H),
        "n_w2": w(ks[9], H, H, 1.0 / float(H) ** 0.5), "n_b2": b(ks[10], H),
    }
    n_w1 = w(ks[7], 2 * H, H, 1.0 / float(2 * H) ** 0.5)
    p["n_w1_h"], p["n_w1_agg"] = n_w1[:H], n_w1[H:]
    return p


# ----------------------------------------------------------------------------
if __name__ == "__main__":
    N, H, D_EDGE, E = 16, 32, 8, 64

    key = jax.random.PRNGKey(0)
    k_h, k_x, k_e, k_a, k_p = jax.random.split(key, 5)

    h = jax.random.normal(k_h, (N, H), jnp.float32)
    x = jax.random.normal(k_x, (N, 3), jnp.float32)
    edge_index = jax.random.randint(k_e, (2, E), 0, N, dtype=jnp.int32)
    edge_attr = jax.random.normal(k_a, (E, D_EDGE), jnp.float32)
    params = init_params(k_p, H, H, D_EDGE)

    fwd = jax.jit(egcl_forward)
    h_out, coord_out, ea_out = fwd(params, h, edge_index, x, edge_attr)
    (h_out, coord_out) = jax.block_until_ready((h_out, coord_out))

    # correctness vs. a pure-f32 reference (tolerances reflect bf16 MXU operands)
    h_ref, coord_ref = egcl_reference(params, h, edge_index, x, edge_attr)

    assert h_out.shape == (N, H) and coord_out.shape == (N, 3)
    assert bool(jnp.all(jnp.isfinite(h_out))) and bool(jnp.all(jnp.isfinite(coord_out)))
    assert bool(jnp.allclose(h_out, h_ref, atol=1e-1, rtol=5e-2)), \
        f"h mismatch, max err {float(jnp.max(jnp.abs(h_out - h_ref)))}"
    assert bool(jnp.allclose(coord_out, coord_ref, atol=5e-3, rtol=5e-3)), \
        f"coord mismatch, max err {float(jnp.max(jnp.abs(coord_out - coord_ref)))}"
    assert bool(jnp.allclose(coord_out - x, coord_ref - x, atol=5e-3)), \
        "coord update mismatch"

    print("KERNEL_OK")
</pallas_src>

<mosaic_0001>
module attributes {stable_mosaic.version = 11 : i64} {
  func.func @_egcl_fused_kernel(%arg0: i32, %arg1: memref<16x32xf32, #tpu.memory_space<vmem>>, %arg2: memref<16x3xf32, #tpu.memory_space<vmem>>, %arg3: memref<64x8xf32, #tpu.memory_space<vmem>>, %arg4: memref<64x16xf32, #tpu.memory_space<vmem>>, %arg5: memref<64x16xf32, #tpu.memory_space<vmem>>, %arg6: memref<16x64xf32, #tpu.memory_space<vmem>>, %arg7: memref<32x32xf32, #tpu.memory_space<vmem>>, %arg8: memref<32x32xf32, #tpu.memory_space<vmem>>, %arg9: memref<1x32xf32, #tpu.memory_space<vmem>>, %arg10: memref<8x32xf32, #tpu.memory_space<vmem>>, %arg11: memref<1x32xf32, #tpu.memory_space<vmem>>, %arg12: memref<32x32xf32, #tpu.memory_space<vmem>>, %arg13: memref<1x32xf32, #tpu.memory_space<vmem>>, %arg14: memref<32x32xf32, #tpu.memory_space<vmem>>, %arg15: memref<1x32xf32, #tpu.memory_space<vmem>>, %arg16: memref<1x32xf32, #tpu.memory_space<vmem>>, %arg17: memref<32x32xf32, #tpu.memory_space<vmem>>, %arg18: memref<32x32xf32, #tpu.memory_space<vmem>>, %arg19: memref<1x32xf32, #tpu.memory_space<vmem>>, %arg20: memref<32x32xf32, #tpu.memory_space<vmem>>, %arg21: memref<1x32xf32, #tpu.memory_space<vmem>>, %arg22: memref<16x32xf32, #tpu.memory_space<vmem>>, %arg23: memref<16x3xf32, #tpu.memory_space<vmem>>) attributes {dimension_semantics = [#tpu.dimension_semantics<arbitrary>], iteration_bounds = array<i64: 1>, scalar_prefetch = 0 : i64, scratch_operands = 0 : i64, tpu.core_type = #tpu.core_type<tc>, window_params = [{pipeline_mode = #tpu.pipeline_mode<synchronous>, transform_indices = @transform_0, window_bounds = array<i64: 16, 32>}, {pipeline_mode = #tpu.pipeline_mode<synchronous>, transform_indices = @transform_1, window_bounds = array<i64: 16, 3>}, {pipeline_mode = #tpu.pipeline_mode<synchronous>, transform_indices = @transform_2, window_bounds = array<i64: 64, 8>}, {pipeline_mode = #tpu.pipeline_mode<synchronous>, transform_indices = @transform_3, window_bounds = array<i64: 64, 16>}, {pipeline_mode = #tpu.pipeline_mode<synchronous>, transform_indices = @transform_4, window_bounds = array<i64: 64, 16>}, {pipeline_mode = #tpu.pipeline_mode<synchronous>, transform_indices = @transform_5, window_bounds = array<i64: 16, 64>}, {pipeline_mode = #tpu.pipeline_mode<synchronous>, transform_indices = @transform_6, window_bounds = array<i64: 32, 32>}, {pipeline_mode = #tpu.pipeline_mode<synchronous>, transform_indices = @transform_7, window_bounds = array<i64: 32, 32>}, {pipeline_mode = #tpu.pipeline_mode<synchronous>, transform_indices = @transform_8, window_bounds = array<i64: 1, 32>}, {pipeline_mode = #tpu.pipeline_mode<synchronous>, transform_indices = @transform_9, window_bounds = array<i64: 8, 32>}, {pipeline_mode = #tpu.pipeline_mode<synchronous>, transform_indices = @transform_10, window_bounds = array<i64: 1, 32>}, {pipeline_mode = #tpu.pipeline_mode<synchronous>, transform_indices = @transform_11, window_bounds = array<i64: 32, 32>}, {pipeline_mode = #tpu.pipeline_mode<synchronous>, transform_indices = @transform_12, window_bounds = array<i64: 1, 32>}, {pipeline_mode = #tpu.pipeline_mode<synchronous>, transform_indices = @transform_13, window_bounds = array<i64: 32, 32>}, {pipeline_mode = #tpu.pipeline_mode<synchronous>, transform_indices = @transform_14, window_bounds = array<i64: 1, 32>}, {pipeline_mode = #tpu.pipeline_mode<synchronous>, transform_indices = @transform_15, window_bounds = array<i64: 1, 32>}, {pipeline_mode = #tpu.pipeline_mode<synchronous>, transform_indices = @transform_16, window_bounds = array<i64: 32, 32>}, {pipeline_mode = #tpu.pipeline_mode<synchronous>, transform_indices = @transform_17, window_bounds = array<i64: 32, 32>}, {pipeline_mode = #tpu.pipeline_mode<synchronous>, transform_indices = @transform_18, window_bounds = array<i64: 1, 32>}, {pipeline_mode = #tpu.pipeline_mode<synchronous>, transform_indices = @transform_19, window_bounds = array<i64: 32, 32>}, {pipeline_mode = #tpu.pipeline_mode<synchronous>, transform_indices = @transform_20, window_bounds = array<i64: 1, 32>}, {pipeline_mode = #tpu.pipeline_mode<synchronous>, transform_indices = @transform_21, window_bounds = array<i64: 16, 32>}, {pipeline_mode = #tpu.pipeline_mode<synchronous>, transform_indices = @transform_22, window_bounds = array<i64: 16, 3>}]} {
    %c0 = arith.constant 0 : index
    %c0_0 = arith.constant 0 : index
    %0 = vector.load %arg1[%c0, %c0_0] : memref<16x32xf32, #tpu.memory_space<vmem>>, vector<16x32xf32>
    %c0_1 = arith.constant 0 : index
    %c0_2 = arith.constant 0 : index
    %1 = vector.load %arg2[%c0_1, %c0_2] : memref<16x3xf32, #tpu.memory_space<vmem>>, vector<16x3xf32>
    %c0_3 = arith.constant 0 : index
    %c0_4 = arith.constant 0 : index
    %2 = vector.load %arg4[%c0_3, %c0_4] : memref<64x16xf32, #tpu.memory_space<vmem>>, vector<64x16xf32>
    %c0_5 = arith.constant 0 : index
    %c0_6 = arith.constant 0 : index
    %3 = vector.load %arg5[%c0_5, %c0_6] : memref<64x16xf32, #tpu.memory_space<vmem>>, vector<64x16xf32>
    %c0_7 = arith.constant 0 : index
    %c0_8 = arith.constant 0 : index
    %4 = vector.load %arg6[%c0_7, %c0_8] : memref<16x64xf32, #tpu.memory_space<vmem>>, vector<16x64xf32>
    %cst = arith.constant dense<0.000000e+00> : vector<64x32xf32>
    %5 = tpu.matmul %2, %0, %cst {dimension_numbers = #tpu.dot_dimension_numbers<[1], [0], [0], [1], [0, 0, 1, 1], [], []>} : vector<64x16xf32>, vector<16x32xf32>, vector<64x32xf32> -> vector<64x32xf32>
    %cst_9 = arith.constant dense<0.000000e+00> : vector<64x32xf32>
    %6 = tpu.matmul %3, %0, %cst_9 {dimension_numbers = #tpu.dot_dimension_numbers<[1], [0], [0], [1], [0, 0, 1, 1], [], []>} : vector<64x16xf32>, vector<16x32xf32>, vector<64x32xf32> -> vector<64x32xf32>
    %cst_10 = arith.constant dense<0.000000e+00> : vector<64x3xf32>
    %7 = tpu.matmul %2, %1, %cst_10 {dimension_numbers = #tpu.dot_dimension_numbers<[1], [0], [0], [1], [0, 0, 1, 1], [], []>} : vector<64x16xf32>, vector<16x3xf32>, vector<64x3xf32> -> vector<64x3xf32>
    %cst_11 = arith.constant dense<0.000000e+00> : vector<64x3xf32>
    %8 = tpu.matmul %3, %1, %cst_11 {dimension_numbers = #tpu.dot_dimension_numbers<[1], [0], [0], [1], [0, 0, 1, 1], [], []>} : vector<64x16xf32>, vector<16x3xf32>, vector<64x3xf32> -> vector<64x3xf32>
    %9 = arith.subf %7, %8 : vector<64x3xf32>
    %10 = arith.mulf %9, %9 : vector<64x3xf32>
    %cst_12 = arith.constant dense<0.000000e+00> : vector<64xf32>
    %11 = vector.multi_reduction <add>, %10, %cst_12 [1] : vector<64x3xf32> to vector<64xf32>
    %12 = vector.shape_cast %11 : vector<64xf32> to vector<64x1xf32>
    %13 = arith.truncf %5 : vector<64x32xf32> to vector<64x32xbf16>
    %c0_13 = arith.constant 0 : index
    %c0_14 = arith.constant 0 : index
    %14 = vector.load %arg7[%c0_13, %c0_14] : memref<32x32xf32, #tpu.memory_space<vmem>>, vector<32x32xf32>
    %15 = arith.truncf %14 : vector<32x32xf32> to vector<32x32xbf16>
    %cst_15 = arith.constant dense<0.000000e+00> : vector<64x32xf32>
    %16 = tpu.matmul %13, %15, %cst_15 {dimension_numbers = #tpu.dot_dimension_numbers<[1], [0], [0], [1], [0, 0, 1, 1], [], []>} : vector<64x32xbf16>, vector<32x32xbf16>, vector<64x32xf32> -> vector<64x32xf32>
    %17 = arith.truncf %6 : vector<64x32xf32> to vector<64x32xbf16>
    %c0_16 = arith.constant 0 : index
    %c0_17 = arith.constant 0 : index
    %18 = vector.load %arg8[%c0_16, %c0_17] : memref<32x32xf32, #tpu.memory_space<vmem>>, vector<32x32xf32>
    %19 = arith.truncf %18 : vector<32x32xf32> to vector<32x32xbf16>
    %cst_18 = arith.constant dense<0.000000e+00> : vector<64x32xf32>
    %20 = tpu.matmul %17, %19, %cst_18 {dimension_numbers = #tpu.dot_dimension_numbers<[1], [0], [0], [1], [0, 0, 1, 1], [], []>} : vector<64x32xbf16>, vector<32x32xbf16>, vector<64x32xf32> -> vector<64x32xf32>
    %21 = arith.addf %16, %20 : vector<64x32xf32>
    %c0_19 = arith.constant 0 : index
    %c0_20 = arith.constant 0 : index
    %22 = vector.load %arg3[%c0_19, %c0_20] : memref<64x8xf32, #tpu.memory_space<vmem>>, vector<64x8xf32>
    %23 = arith.truncf %22 : vector<64x8xf32> to vector<64x8xbf16>
    %c0_21 = arith.constant 0 : index
    %c0_22 = arith.constant 0 : index
    %24 = vector.load %arg10[%c0_21, %c0_22] : memref<8x32xf32, #tpu.memory_space<vmem>>, vector<8x32xf32>
    %25 = arith.truncf %24 : vector<8x32xf32> to vector<8x32xbf16>
    %cst_23 = arith.constant dense<0.000000e+00> : vector<64x32xf32>
    %26 = tpu.matmul %23, %25, %cst_23 {dimension_numbers = #tpu.dot_dimension_numbers<[1], [0], [0], [1], [0, 0, 1, 1], [], []>} : vector<64x8xbf16>, vector<8x32xbf16>, vector<64x32xf32> -> vector<64x32xf32>
    %27 = arith.addf %21, %26 : vector<64x32xf32>
    %28 = vector.shape_cast %12 : vector<64x1xf32> to vector<64x1xf32>
    %29 = vector.broadcast %28 : vector<64x1xf32> to vector<64x32xf32>
    %c0_24 = arith.constant 0 : index
    %c0_25 = arith.constant 0 : index
    %30 = vector.load %arg9[%c0_24, %c0_25] : memref<1x32xf32, #tpu.memory_space<vmem>>, vector<1x32xf32>
    %31 = vector.broadcast %30 : vector<1x32xf32> to vector<64x32xf32>
    %32 = arith.mulf %29, %31 : vector<64x32xf32>
    %33 = arith.addf %27, %32 : vector<64x32xf32>
    %c0_26 = arith.constant 0 : index
    %c0_27 = arith.constant 0 : index
    %34 = vector.load %arg11[%c0_26, %c0_27] : memref<1x32xf32, #tpu.memory_space<vmem>>, vector<1x32xf32>
    %35 = vector.broadcast %34 : vector<1x32xf32> to vector<64x32xf32>
    %36 = arith.addf %33, %35 : vector<64x32xf32>
    %37 = arith.negf %36 : vector<64x32xf32>
    %38 = math.exp %37 : vector<64x32xf32>
    %cst_28 = arith.constant 1.000000e+00 : f32
    %39 = vector.broadcast %cst_28 : f32 to vector<64x32xf32>
    %40 = arith.addf %39, %38 : vector<64x32xf32>
    %41 = arith.divf %39, %40 : vector<64x32xf32>
    %42 = arith.mulf %36, %41 : vector<64x32xf32>
    %43 = arith.truncf %42 : vector<64x32xf32> to vector<64x32xbf16>
    %c0_29 = arith.constant 0 : index
    %c0_30 = arith.constant 0 : index
    %44 = vector.load %arg12[%c0_29, %c0_30] : memref<32x32xf32, #tpu.memory_space<vmem>>, vector<32x32xf32>
    %45 = arith.truncf %44 : vector<32x32xf32> to vector<32x32xbf16>
    %cst_31 = arith.constant dense<0.000000e+00> : vector<64x32xf32>
    %46 = tpu.matmul %43, %45, %cst_31 {dimension_numbers = #tpu.dot_dimension_numbers<[1], [0], [0], [1], [0, 0, 1, 1], [], []>} : vector<64x32xbf16>, vector<32x32xbf16>, vector<64x32xf32> -> vector<64x32xf32>
    %c0_32 = arith.constant 0 : index
    %c0_33 = arith.constant 0 : index
    %47 = vector.load %arg13[%c0_32, %c0_33] : memref<1x32xf32, #tpu.memory_space<vmem>>, vector<1x32xf32>
    %48 = vector.broadcast %47 : vector<1x32xf32> to vector<64x32xf32>
    %49 = arith.addf %46, %48 : vector<64x32xf32>
    %50 = arith.negf %49 : vector<64x32xf32>
    %51 = math.exp %50 : vector<64x32xf32>
    %cst_34 = arith.constant 1.000000e+00 : f32
    %52 = vector.broadcast %cst_34 : f32 to vector<64x32xf32>
    %53 = arith.addf %52, %51 : vector<64x32xf32>
    %54 = arith.divf %52, %53 : vector<64x32xf32>
    %55 = arith.mulf %49, %54 : vector<64x32xf32>
    %56 = arith.truncf %55 : vector<64x32xf32> to vector<64x32xbf16>
    %c0_35 = arith.constant 0 : index
    %c0_36 = arith.constant 0 : index
    %57 = vector.load %arg14[%c0_35, %c0_36] : memref<32x32xf32, #tpu.memory_space<vmem>>, vector<32x32xf32>
    %58 = arith.truncf %57 : vector<32x32xf32> to vector<32x32xbf16>
    %cst_37 = arith.constant dense<0.000000e+00> : vector<64x32xf32>
    %59 = tpu.matmul %56, %58, %cst_37 {dimension_numbers = #tpu.dot_dimension_numbers<[1], [0], [0], [1], [0, 0, 1, 1], [], []>} : vector<64x32xbf16>, vector<32x32xbf16>, vector<64x32xf32> -> vector<64x32xf32>
    %c0_38 = arith.constant 0 : index
    %c0_39 = arith.constant 0 : index
    %60 = vector.load %arg15[%c0_38, %c0_39] : memref<1x32xf32, #tpu.memory_space<vmem>>, vector<1x32xf32>
    %61 = vector.broadcast %60 : vector<1x32xf32> to vector<64x32xf32>
    %62 = arith.addf %59, %61 : vector<64x32xf32>
    %63 = arith.negf %62 : vector<64x32xf32>
    %64 = math.exp %63 : vector<64x32xf32>
    %cst_40 = arith.constant 1.000000e+00 : f32
    %65 = vector.broadcast %cst_40 : f32 to vector<64x32xf32>
    %66 = arith.addf %65, %64 : vector<64x32xf32>
    %67 = arith.divf %65, %66 : vector<64x32xf32>
    %68 = arith.mulf %62, %67 : vector<64x32xf32>
    %c0_41 = arith.constant 0 : index
    %c0_42 = arith.constant 0 : index
    %69 = vector.load %arg16[%c0_41, %c0_42] : memref<1x32xf32, #tpu.memory_space<vmem>>, vector<1x32xf32>
    %70 = vector.broadcast %69 : vector<1x32xf32> to vector<64x32xf32>
    %71 = arith.mulf %68, %70 : vector<64x32xf32>
    %cst_43 = arith.constant dense<0.000000e+00> : vector<64xf32>
    %72 = vector.multi_reduction <add>, %71, %cst_43 [1] : vector<64x32xf32> to vector<64xf32>
    %73 = vector.shape_cast %72 : vector<64xf32> to vector<64x1xf32>
    %74 = vector.broadcast %73 : vector<64x1xf32> to vector<64x3xf32>
    %75 = arith.mulf %9, %74 : vector<64x3xf32>
    %cst_44 = arith.constant dense<0.000000e+00> : vector<16x3xf32>
    %76 = tpu.matmul %4, %75, %cst_44 {dimension_numbers = #tpu.dot_dimension_numbers<[1], [0], [0], [1], [0, 0, 1, 1], [], []>} : vector<16x64xf32>, vector<64x3xf32>, vector<16x3xf32> -> vector<16x3xf32>
    %cst_45 = arith.constant dense<0.000000e+00> : vector<16xf32>
    %77 = vector.multi_reduction <add>, %4, %cst_45 [1] : vector<16x64xf32> to vector<16xf32>
    %78 = vector.shape_cast %77 : vector<16xf32> to vector<16x1xf32>
    %cst_46 = arith.constant 1.000000e+00 : f32
    %79 = vector.broadcast %cst_46 : f32 to vector<16x1xf32>
    %80 = arith.maximumf %78, %79 : vector<16x1xf32>
    %81 = tpu.reciprocal %80 {approx = true} : vector<16x1xf32> -> vector<16x1xf32>
    %82 = vector.broadcast %81 : vector<16x1xf32> to vector<16x3xf32>
    %83 = arith.mulf %76, %82 : vector<16x3xf32>
    %84 = arith.addf %1, %83 : vector<16x3xf32>
    %c0_47 = arith.constant 0 : index
    %c0_48 = arith.constant 0 : index
    %85 = vector.load %arg23[%c0_47, %c0_48] : memref<16x3xf32, #tpu.memory_space<vmem>>, vector<16x3xf32>
    tpu.vector_store %arg23[%c0_47, %c0_48], %84 {strides = array<i32>} : memref<16x3xf32, #tpu.memory_space<vmem>>, vector<16x3xf32>,
    %cst_49 = arith.constant dense<0.000000e+00> : vector<16x32xf32>
    %86 = tpu.matmul %4, %55, %cst_49 {dimension_numbers = #tpu.dot_dimension_numbers<[1], [0], [0], [1], [0, 0, 1, 1], [], []>} : vector<16x64xf32>, vector<64x32xf32>, vector<16x32xf32> -> vector<16x32xf32>
    %87 = arith.truncf %0 : vector<16x32xf32> to vector<16x32xbf16>
    %c0_50 = arith.constant 0 : index
    %c0_51 = arith.constant 0 : index
    %88 = vector.load %arg17[%c0_50, %c0_51] : memref<32x32xf32, #tpu.memory_space<vmem>>, vector<32x32xf32>
    %89 = arith.truncf %88 : vector<32x32xf32> to vector<32x32xbf16>
    %cst_52 = arith.constant dense<0.000000e+00> : vector<16x32xf32>
    %90 = tpu.matmul %87, %89, %cst_52 {dimension_numbers = #tpu.dot_dimension_numbers<[1], [0], [0], [1], [0, 0, 1, 1], [], []>} : vector<16x32xbf16>, vector<32x32xbf16>, vector<16x32xf32> -> vector<16x32xf32>
    %91 = arith.truncf %86 : vector<16x32xf32> to vector<16x32xbf16>
    %c0_53 = arith.constant 0 : index
    %c0_54 = arith.constant 0 : index
    %92 = vector.load %arg18[%c0_53, %c0_54] : memref<32x32xf32, #tpu.memory_space<vmem>>, vector<32x32xf32>
    %93 = arith.truncf %92 : vector<32x32xf32> to vector<32x32xbf16>
    %cst_55 = arith.constant dense<0.000000e+00> : vector<16x32xf32>
    %94 = tpu.matmul %91, %93, %cst_55 {dimension_numbers = #tpu.dot_dimension_numbers<[1], [0], [0], [1], [0, 0, 1, 1], [], []>} : vector<16x32xbf16>, vector<32x32xbf16>, vector<16x32xf32> -> vector<16x32xf32>
    %95 = arith.addf %90, %94 : vector<16x32xf32>
    %c0_56 = arith.constant 0 : index
    %c0_57 = arith.constant 0 : index
    %96 = vector.load %arg19[%c0_56, %c0_57] : memref<1x32xf32, #tpu.memory_space<vmem>>, vector<1x32xf32>
    %97 = vector.broadcast %96 : vector<1x32xf32> to vector<16x32xf32>
    %98 = arith.addf %95, %97 : vector<16x32xf32>
    %99 = arith.negf %98 : vector<16x32xf32>
    %100 = math.exp %99 : vector<16x32xf32>
    %cst_58 = arith.constant 1.000000e+00 : f32
    %101 = vector.broadcast %cst_58 : f32 to vector<16x32xf32>
    %102 = arith.addf %101, %100 : vector<16x32xf32>
    %103 = arith.divf %101, %102 : vector<16x32xf32>
    %104 = arith.mulf %98, %103 : vector<16x32xf32>
    %105 = arith.truncf %104 : vector<16x32xf32> to vector<16x32xbf16>
    %c0_59 = arith.constant 0 : index
    %c0_60 = arith.constant 0 : index
    %106 = vector.load %arg20[%c0_59, %c0_60] : memref<32x32xf32, #tpu.memory_space<vmem>>, vector<32x32xf32>
    %107 = arith.truncf %106 : vector<32x32xf32> to vector<32x32xbf16>
    %cst_61 = arith.constant dense<0.000000e+00> : vector<16x32xf32>
    %108 = tpu.matmul %105, %107, %cst_61 {dimension_numbers = #tpu.dot_dimension_numbers<[1], [0], [0], [1], [0, 0, 1, 1], [], []>} : vector<16x32xbf16>, vector<32x32xbf16>, vector<16x32xf32> -> vector<16x32xf32>
    %109 = arith.addf %0, %108 : vector<16x32xf32>
    %c0_62 = arith.constant 0 : index
    %c0_63 = arith.constant 0 : index
    %110 = vector.load %arg21[%c0_62, %c0_63] : memref<1x32xf32, #tpu.memory_space<vmem>>, vector<1x32xf32>
    %111 = vector.broadcast %110 : vector<1x32xf32> to vector<16x32xf32>
    %112 = arith.addf %109, %111 : vector<16x32xf32>
    %c0_64 = arith.constant 0 : index
    %c0_65 = arith.constant 0 : index
    %113 = vector.load %arg22[%c0_64, %c0_65] : memref<16x32xf32, #tpu.memory_space<vmem>>, vector<16x32xf32>
    tpu.vector_store %arg22[%c0_64, %c0_65], %112 {strides = array<i32>} : memref<16x32xf32, #tpu.memory_space<vmem>>, vector<16x32xf32>,
    return
  }
  func.func @transform_0(%arg0: i32) -> (i32, i32) {
    %c0_i32 = arith.constant 0 : i32
    %c0_i32_0 = arith.constant 0 : i32
    %c0_i32_1 = arith.constant 0 : i32
    return %c0_i32, %c0_i32_0 : i32, i32
  }
  func.func @transform_1(%arg0: i32) -> (i32, i32) {
    %c0_i32 = arith.constant 0 : i32
    %c0_i32_0 = arith.constant 0 : i32
    %c0_i32_1 = arith.constant 0 : i32
    return %c0_i32, %c0_i32_0 : i32, i32
  }
  func.func @transform_2(%arg0: i32) -> (i32, i32) {
    %c0_i32 = arith.constant 0 : i32
    %c0_i32_0 = arith.constant 0 : i32
    %c0_i32_1 = arith.constant 0 : i32
    return %c0_i32, %c0_i32_0 : i32, i32
  }
  func.func @transform_3(%arg0: i32) -> (i32, i32) {
    %c0_i32 = arith.constant 0 : i32
    %c0_i32_0 = arith.constant 0 : i32
    %c0_i32_1 = arith.constant 0 : i32
    return %c0_i32, %c0_i32_0 : i32, i32
  }
  func.func @transform_4(%arg0: i32) -> (i32, i32) {
    %c0_i32 = arith.constant 0 : i32
    %c0_i32_0 = arith.constant 0 : i32
    %c0_i32_1 = arith.constant 0 : i32
    return %c0_i32, %c0_i32_0 : i32, i32
  }
  func.func @transform_5(%arg0: i32) -> (i32, i32) {
    %c0_i32 = arith.constant 0 : i32
    %c0_i32_0 = arith.constant 0 : i32
    %c0_i32_1 = arith.constant 0 : i32
    return %c0_i32, %c0_i32_0 : i32, i32
  }
  func.func @transform_6(%arg0: i32) -> (i32, i32) {
    %c0_i32 = arith.constant 0 : i32
    %c0_i32_0 = arith.constant 0 : i32
    %c0_i32_1 = arith.constant 0 : i32
    return %c0_i32, %c0_i32_0 : i32, i32
  }
  func.func @transform_7(%arg0: i32) -> (i32, i32) {
    %c0_i32 = arith.constant 0 : i32
    %c0_i32_0 = arith.constant 0 : i32
    %c0_i32_1 = arith.constant 0 : i32
    return %c0_i32, %c0_i32_0 : i32, i32
  }
  func.func @transform_8(%arg0: i32) -> (i32, i32) {
    %c0_i32 = arith.constant 0 : i32
    %c0_i32_0 = arith.constant 0 : i32
    %c0_i32_1 = arith.constant 0 : i32
    return %c0_i32, %c0_i32_0 : i32, i32
  }
  func.func @transform_9(%arg0: i32) -> (i32, i32) {
    %c0_i32 = arith.constant 0 : i32
    %c0_i32_0 = arith.constant 0 : i32
    %c0_i32_1 = arith.constant 0 : i32
    return %c0_i32, %c0_i32_0 : i32, i32
  }
  func.func @transform_10(%arg0: i32) -> (i32, i32) {
    %c0_i32 = arith.constant 0 : i32
    %c0_i32_0 = arith.constant 0 : i32
    %c0_i32_1 = arith.constant 0 : i32
    return %c0_i32, %c0_i32_0 : i32, i32
  }
  func.func @transform_11(%arg0: i32) -> (i32, i32) {
    %c0_i32 = arith.constant 0 : i32
    %c0_i32_0 = arith.constant 0 : i32
    %c0_i32_1 = arith.constant 0 : i32
    return %c0_i32, %c0_i32_0 : i32, i32
  }
  func.func @transform_12(%arg0: i32) -> (i32, i32) {
    %c0_i32 = arith.constant 0 : i32
    %c0_i32_0 = arith.constant 0 : i32
    %c0_i32_1 = arith.constant 0 : i32
    return %c0_i32, %c0_i32_0 : i32, i32
  }
  func.func @transform_13(%arg0: i32) -> (i32, i32) {
    %c0_i32 = arith.constant 0 : i32
    %c0_i32_0 = arith.constant 0 : i32
    %c0_i32_1 = arith.constant 0 : i32
    return %c0_i32, %c0_i32_0 : i32, i32
  }
  func.func @transform_14(%arg0: i32) -> (i32, i32) {
    %c0_i32 = arith.constant 0 : i32
    %c0_i32_0 = arith.constant 0 : i32
    %c0_i32_1 = arith.constant 0 : i32
    return %c0_i32, %c0_i32_0 : i32, i32
  }
  func.func @transform_15(%arg0: i32) -> (i32, i32) {
    %c0_i32 = arith.constant 0 : i32
    %c0_i32_0 = arith.constant 0 : i32
    %c0_i32_1 = arith.constant 0 : i32
    return %c0_i32, %c0_i32_0 : i32, i32
  }
  func.func @transform_16(%arg0: i32) -> (i32, i32) {
    %c0_i32 = arith.constant 0 : i32
    %c0_i32_0 = arith.constant 0 : i32
    %c0_i32_1 = arith.constant 0 : i32
    return %c0_i32, %c0_i32_0 : i32, i32
  }
  func.func @transform_17(%arg0: i32) -> (i32, i32) {
    %c0_i32 = arith.constant 0 : i32
    %c0_i32_0 = arith.constant 0 : i32
    %c0_i32_1 = arith.constant 0 : i32
    return %c0_i32, %c0_i32_0 : i32, i32
  }
  func.func @transform_18(%arg0: i32) -> (i32, i32) {
    %c0_i32 = arith.constant 0 : i32
    %c0_i32_0 = arith.constant 0 : i32
    %c0_i32_1 = arith.constant 0 : i32
    return %c0_i32, %c0_i32_0 : i32, i32
  }
  func.func @transform_19(%arg0: i32) -> (i32, i32) {
    %c0_i32 = arith.constant 0 : i32
    %c0_i32_0 = arith.constant 0 : i32
    %c0_i32_1 = arith.constant 0 : i32
    return %c0_i32, %c0_i32_0 : i32, i32
  }
  func.func @transform_20(%arg0: i32) -> (i32, i32) {
    %c0_i32 = arith.constant 0 : i32
    %c0_i32_0 = arith.constant 0 : i32
    %c0_i32_1 = arith.constant 0 : i32
    return %c0_i32, %c0_i32_0 : i32, i32
  }
  func.func @transform_21(%arg0: i32) -> (i32, i32) {
    %c0_i32 = arith.constant 0 : i32
    %c0_i32_0 = arith.constant 0 : i32
    %c0_i32_1 = arith.constant 0 : i32
    return %c0_i32, %c0_i32_0 : i32, i32
  }
  func.func @transform_22(%arg0: i32) -> (i32, i32) {
    %c0_i32 = arith.constant 0 : i32
    %c0_i32_0 = arith.constant 0 : i32
    %c0_i32_1 = arith.constant 0 : i32
    return %c0_i32, %c0_i32_0 : i32, i32
  }
}

</mosaic_0001>

<llo_original>
// kernel: egcl_forward.1
$region0: #{egcl_forward.1}
  #allocation0 [shape = 'u32[]', space=smem, size = 0x4, offset = 0x4, fixed_abs, tag = 'smem constant byte address 0x4 - core index']
  #allocation1 [shape = 'u32[144,128]{1,0:T(1,128)}', space=vmem, size = 0x12000, scoped, tag = 'internal scratch']
  %s0 = inlined_call_operand.vmem [shape: f32[16,32], index: 0, kind: input, shape index: {}]
  %s1 = inlined_call_operand.vmem [shape: f32[16,3], index: 1, kind: input, shape index: {}]
  %s2 = inlined_call_operand.vmem [shape: f32[64,8], index: 2, kind: input, shape index: {}]
  %s3 = inlined_call_operand.vmem [shape: f32[64,16], index: 3, kind: input, shape index: {}]
  %s4 = inlined_call_operand.vmem [shape: f32[64,16], index: 4, kind: input, shape index: {}]
  %s5 = inlined_call_operand.vmem [shape: f32[16,64], index: 5, kind: input, shape index: {}]
  %s6 = inlined_call_operand.vmem [shape: f32[32,32], index: 6, kind: input, shape index: {}]
  %s7 = inlined_call_operand.vmem [shape: f32[32,32], index: 7, kind: input, shape index: {}]
  %s8 = inlined_call_operand.vmem [shape: f32[1,32], index: 8, kind: input, shape index: {}]
  %s9 = inlined_call_operand.vmem [shape: f32[8,32], index: 9, kind: input, shape index: {}]
  %s10 = inlined_call_operand.vmem [shape: f32[1,32], index: 10, kind: input, shape index: {}]
  %s11 = inlined_call_operand.vmem [shape: f32[32,32], index: 11, kind: input, shape index: {}]
  %s12 = inlined_call_operand.vmem [shape: f32[1,32], index: 12, kind: input, shape index: {}]
  %s13 = inlined_call_operand.vmem [shape: f32[32,32], index: 13, kind: input, shape index: {}]
  %s14 = inlined_call_operand.vmem [shape: f32[1,32], index: 14, kind: input, shape index: {}]
  %s15 = inlined_call_operand.vmem [shape: f32[1,32], index: 15, kind: input, shape index: {}]
  %s16 = inlined_call_operand.vmem [shape: f32[32,32], index: 16, kind: input, shape index: {}]
  %s17 = inlined_call_operand.vmem [shape: f32[32,32], index: 17, kind: input, shape index: {}]
  %s18 = inlined_call_operand.vmem [shape: f32[1,32], index: 18, kind: input, shape index: {}]
  %s19 = inlined_call_operand.vmem [shape: f32[32,32], index: 19, kind: input, shape index: {}]
  %s20 = inlined_call_operand.vmem [shape: f32[1,32], index: 20, kind: input, shape index: {}]
  %s21 = inlined_call_operand.hbm [shape: f32[16,32], index: 21, kind: output, shape index: {0}]
  %s22 = inlined_call_operand.vmem [shape: f32[16,3], index: 22, kind: output, shape index: {1}]
  %23 = xla_tuple %s21, %s22
  %s24 = sld [smem:[#allocation0]]
  $region102: #{egcl_forward.1} parent=0
    _
  %s26 = ssub.s32 1, %s24
  %s27 = scalar_select 0, %s26, %s24
  $region1: #{egcl_forward.1} parent=0
    #allocation2 [shape = 'u8[8192]{0}', space=vmem, size = 0x2000, scoped, tag = 'output window, operand 0, single buffered']
    #allocation3 [shape = 's32[1]{0}', space=sflag, size = 0x4, scoped, tag = 'scoped memory for egcl_forward.1']
    %28 = vsyncpa [#allocation3], 0
    // Predicated region
    $region2: #{egcl_forward.1} parent=1 // pred_check
      _
    $region3: #{egcl_forward.1} parent=1 // pred_check_branch
      %30 = sbr.rel (0) target = $region5
    $region4: #{egcl_forward.1} parent=1 // pred_region
      _
    $region5: #{egcl_forward.1} parent=1 // pred_fallthru
      _
    // Predicated region
    $region6: #{egcl_forward.1} parent=1 // pred_check
      _
    $region7: #{egcl_forward.1} parent=1 // pred_check_branch
      %32 = sbr.rel (0) target = $region9
    $region8: #{egcl_forward.1} parent=1 // pred_region
      _
    $region9: #{egcl_forward.1} parent=1 // pred_fallthru
      _
    // Predicated region
    $region10: #{egcl_forward.1} parent=1 // pred_check
      _
    $region11: #{egcl_forward.1} parent=1 // pred_check_branch
      %34 = sbr.rel (0) target = $region13
    $region12: #{egcl_forward.1} parent=1 // pred_region
      _
    $region13: #{egcl_forward.1} parent=1 // pred_fallthru
      _
    // Predicated region
    $region14: #{egcl_forward.1} parent=1 // pred_check
      _
    $region15: #{egcl_forward.1} parent=1 // pred_check_branch
      %36 = sbr.rel (0) target = $region17
    $region16: #{egcl_forward.1} parent=1 // pred_region
      _
    $region17: #{egcl_forward.1} parent=1 // pred_fallthru
      _
    // Predicated region
    $region18: #{egcl_forward.1} parent=1 // pred_check
      _
    $region19: #{egcl_forward.1} parent=1 // pred_check_branch
      %38 = sbr.rel (0) target = $region21
    $region20: #{egcl_forward.1} parent=1 // pred_region
      _
    $region21: #{egcl_forward.1} parent=1 // pred_fallthru
      _
    // Predicated region
    $region22: #{egcl_forward.1} parent=1 // pred_check
      _
    $region23: #{egcl_forward.1} parent=1 // pred_check_branch
      %40 = sbr.rel (0) target = $region25
    $region24: #{egcl_forward.1} parent=1 // pred_region
      _
    $region25: #{egcl_forward.1} parent=1 // pred_fallthru
      _
    // Predicated region
    $region26: #{egcl_forward.1} parent=1 // pred_check
      _
    $region27: #{egcl_forward.1} parent=1 // pred_check_branch
      %42 = sbr.rel (0) target = $region29
    $region28: #{egcl_forward.1} parent=1 // pred_region
      _
    $region29: #{egcl_forward.1} parent=1 // pred_fallthru
      _
    // Predicated region
    $region30: #{egcl_forward.1} parent=1 // pred_check
      _
    $region31: #{egcl_forward.1} parent=1 // pred_check_branch
      %44 = sbr.rel (0) target = $region33
    $region32: #{egcl_forward.1} parent=1 // pred_region
      _
    $region33: #{egcl_forward.1} parent=1 // pred_fallthru
      _
    // Predicated region
    $region34: #{egcl_forward.1} parent=1 // pred_check
      _
    $region35: #{egcl_forward.1} parent=1 // pred_check_branch
      %46 = sbr.rel (0) target = $region37
    $region36: #{egcl_forward.1} parent=1 // pred_region
      _
    $region37: #{egcl_forward.1} parent=1 // pred_fallthru
      _
    // Predicated region
    $region38: #{egcl_forward.1} parent=1 // pred_check
      _
    $region39: #{egcl_forward.1} parent=1 // pred_check_branch
      %48 = sbr.rel (0) target = $region41
    $region40: #{egcl_forward.1} parent=1 // pred_region
      _
    $region41: #{egcl_forward.1} parent=1 // pred_fallthru
      _
    // Predicated region
    $region42: #{egcl_forward.1} parent=1 // pred_check
      _
    $region43: #{egcl_forward.1} parent=1 // pred_check_branch
      %50 = sbr.rel (0) target = $region45
    $region44: #{egcl_forward.1} parent=1 // pred_region
      _
    $region45: #{egcl_forward.1} parent=1 // pred_fallthru
      _
    // Predicated region
    $region46: #{egcl_forward.1} parent=1 // pred_check
      _
    $region47: #{egcl_forward.1} parent=1 // pred_check_branch
      %52 = sbr.rel (0) target = $region49
    $region48: #{egcl_forward.1} parent=1 // pred_region
      _
    $region49: #{egcl_forward.1} parent=1 // pred_fallthru
      _
    // Predicated region
    $region50: #{egcl_forward.1} parent=1 // pred_check
      _
    $region51: #{egcl_forward.1} parent=1 // pred_check_branch
      %54 = sbr.rel (0) target = $region53
    $region52: #{egcl_forward.1} parent=1 // pred_region
      _
    $region53: #{egcl_forward.1} parent=1 // pred_fallthru
      _
    // Predicated region
    $region54: #{egcl_forward.1} parent=1 // pred_check
      _
    $region55: #{egcl_forward.1} parent=1 // pred_check_branch
      %56 = sbr.rel (0) target = $region57
    $region56: #{egcl_forward.1} parent=1 // pred_region
      _
    $region57: #{egcl_forward.1} parent=1 // pred_fallthru
      _
    // Predicated region
    $region58: #{egcl_forward.1} parent=1 // pred_check
      _
    $region59: #{egcl_forward.1} parent=1 // pred_check_branch
      %58 = sbr.rel (0) target = $region61
    $region60: #{egcl_forward.1} parent=1 // pred_region
      _
    $region61: #{egcl_forward.1} parent=1 // pred_fallthru
      _
    // Predicated region
    $region62: #{egcl_forward.1} parent=1 // pred_check
      _
    $region63: #{egcl_forward.1} parent=1 // pred_check_branch
      %60 = sbr.rel (0) target = $region65
    $region64: #{egcl_forward.1} parent=1 // pred_region
      _
    $region65: #{egcl_forward.1} parent=1 // pred_fallthru
      _
    // Predicated region
    $region66: #{egcl_forward.1} parent=1 // pred_check
      _
    $region67: #{egcl_forward.1} parent=1 // pred_check_branch
      %62 = sbr.rel (0) target = $region69
    $region68: #{egcl_forward.1} parent=1 // pred_region
      _
    $region69: #{egcl_forward.1} parent=1 // pred_fallthru
      _
    // Predicated region
    $region70: #{egcl_forward.1} parent=1 // pred_check
      _
    $region71: #{egcl_forward.1} parent=1 // pred_check_branch
      %64 = sbr.rel (0) target = $region73
    $region72: #{egcl_forward.1} parent=1 // pred_region
      _
    $region73: #{egcl_forward.1} parent=1 // pred_fallthru
      _
    // Predicated region
    $region74: #{egcl_forward.1} parent=1 // pred_check
      _
    $region75: #{egcl_forward.1} parent=1 // pred_check_branch
      %66 = sbr.rel (0) target = $region77
    $region76: #{egcl_forward.1} parent=1 // pred_region
      _
    $region77: #{egcl_forward.1} parent=1 // pred_fallthru
      _
    // Predicated region
    $region78: #{egcl_forward.1} parent=1 // pred_check
      _
    $region79: #{egcl_forward.1} parent=1 // pred_check_branch
      %68 = sbr.rel (0) target = $region81
    $region80: #{egcl_forward.1} parent=1 // pred_region
      _
    $region81: #{egcl_forward.1} parent=1 // pred_fallthru
      _
    // Predicated region
    $region82: #{egcl_forward.1} parent=1 // pred_check
      _
    $region83: #{egcl_forward.1} parent=1 // pred_check_branch
      %70 = sbr.rel (0) target = $region85
    $region84: #{egcl_forward.1} parent=1 // pred_region
      _
    $region85: #{egcl_forward.1} parent=1 // pred_fallthru
      _
    %v72 = vld [vmem:[%s0] sm:$0xff]
    %v73 = vld [vmem:[%s0 + $0x8] sm:$0xff]
    %v74 = vld [vmem:[%s1] sm:$0xff]
    %v75 = vld [vmem:[%s1 + $0x8] sm:$0xff]
    %v76 = vld [vmem:[%s3] sm:$0xff]
    %v77 = vld [vmem:[%s3 + $0x8] sm:$0xff]
    %v78 = vld [vmem:[%s3 + $0x10] sm:$0xff]
    %v79 = vld [vmem:[%s3 + $0x18] sm:$0xff]
    %v80 = vld [vmem:[%s3 + $0x20] sm:$0xff]
    %v81 = vld [vmem:[%s3 + $0x28] sm:$0xff]
    %v82 = vld [vmem:[%s3 + $0x30] sm:$0xff]
    %v83 = vld [vmem:[%s3 + $0x38] sm:$0xff]
    %v84 = vld [vmem:[%s4] sm:$0xff]
    %v85 = vld [vmem:[%s4 + $0x8] sm:$0xff]
    %v86 = vld [vmem:[%s4 + $0x10] sm:$0xff]
    %v87 = vld [vmem:[%s4 + $0x18] sm:$0xff]
    %v88 = vld [vmem:[%s4 + $0x20] sm:$0xff]
    %v89 = vld [vmem:[%s4 + $0x28] sm:$0xff]
    %v90 = vld [vmem:[%s4 + $0x30] sm:$0xff]
    %v91 = vld [vmem:[%s4 + $0x38] sm:$0xff]
    %v92 = vld [vmem:[%s5] sm:$0xff]
    %v93 = vld [vmem:[%s5 + $0x8] sm:$0xff]
    %vm94 = vcmask 130048
    %v96 = vsel %vm94, %v76, 0
    %v99 = vsel %vm94, %v77, 0
    %v102 = vsel %vm94, %v78, 0
    %v105 = vsel %vm94, %v79, 0
    %v108 = vsel %vm94, %v80, 0
    %v111 = vsel %vm94, %v81, 0
    %v114 = vsel %vm94, %v82, 0
    %v117 = vsel %vm94, %v83, 0
    %119 = vmatprep.subr.mxu0 0.0
    %120 = vmatpush1.msra.mxu0 %v72
    %121 = vmatprep.subr.mxu0 0.0
    %122 = vmatpush1.msra.mxu0 %v73
    %123 = vmatprep.subr.mxu0 0.0
    %124 = vmatpush1.msra.mxu0 0.0
    %125 = vmatprep.subr.mxu0 0.0
    %126 = vmatpush1.msra.mxu0 0.0
    %127 = vmatprep.subr.mxu0 0.0
    %128 = vmatpush1.msra.mxu0 0.0
    %129 = vmatprep.subr.mxu0 0.0
    %130 = vmatpush1.msra.mxu0 0.0
    %131 = vmatprep.subr.mxu0 0.0
    %132 = vmatpush1.msra.mxu0 0.0
    %133 = vmatprep.subr.mxu0 0.0
    %134 = vmatpush1.msra.mxu0 0.0
    %135 = vmatprep.subr.mxu0 0.0
    %136 = vmatpush1.msra.mxu0 0.0
    %137 = vmatprep.subr.mxu0 0.0
    %138 = vmatpush1.msra.mxu0 0.0
    %139 = vmatprep.subr.mxu0 0.0
    %140 = vmatpush1.msra.mxu0 0.0
    %141 = vmatprep.subr.mxu0 0.0
    %142 = vmatpush1.msra.mxu0 0.0
    %143 = vmatprep.subr.mxu0 0.0
    %144 = vmatpush1.msra.mxu0 0.0
    %145 = vmatprep.subr.mxu0 0.0
    %146 = vmatpush1.msra.mxu0 0.0
    %147 = vmatprep.subr.mxu0 0.0
    %148 = vmatpush1.msra.mxu0 0.0
    %149 = vmatprep.subr.mxu0 0.0
    %150 = vmatpush1.msra.mxu0 0.0
    %151 = vmatprep.subr.mxu0 0.0
    %152 = vmatpush1.msra.mxu0 0.0
    %153 = vmatprep.subr.mxu0 0.0
    %154 = vmatpush1.msra.mxu0 0.0
    %155 = vmatprep.subr.mxu0 0.0
    %156 = vmatpush1.msra.mxu0 0.0
    %157 = vmatprep.subr.mxu0 0.0
    %158 = vmatpush1.msra.mxu0 0.0
    %159 = vmatprep.subr.mxu0 0.0
    %160 = vmatpush1.msra.mxu0 0.0
    %161 = vmatprep.subr.mxu0 0.0
    %162 = vmatpush1.msra.mxu0 0.0
    %163 = vmatprep.subr.mxu0 0.0
    %164 = vmatpush1.msra.mxu0 0.0
    %165 = vmatprep.subr.mxu0 0.0
    %166 = vmatpush1.msra.mxu0 0.0
    %167 = vmatprep.subr.mxu0 0.0
    %168 = vmatpush1.msra.mxu0 0.0
    %169 = vmatprep.subr.mxu0 0.0
    %170 = vmatpush1.msra.mxu0 0.0
    %171 = vmatprep.subr.mxu0 0.0
    %172 = vmatpush1.msra.mxu0 0.0
    %173 = vmatprep.subr.mxu0 0.0
    %174 = vmatpush1.msra.mxu0 0.0
    %175 = vmatprep.subr.mxu0 0.0
    %176 = vmatpush1.msra.mxu0 0.0
    %177 = vmatprep.subr.mxu0 0.0
    %178 = vmatpush1.msra.mxu0 0.0
    %179 = vmatprep.subr.mxu0 0.0
    %180 = vmatpush1.msra.mxu0 0.0
    %181 = vmatprep.subr.mxu0 0.0
    %182 = vmatpush1.msra.mxu0 0.0
    %183 = vmatprep.mubr.f32.mxu0 0.0
    %184 = vmatmul.mubr.f32.gmra.mrb[0].mxu0 %v96
    %v185 = vpop.f32.mrb[0].mxu0
    %v186 = vadd.f32 0.0, %v185
    %v187 = vpop.f32.mrb[0].mxu0
    %188 = vmatprep.mubr.f32.mxu0 0.0
    %189 = vmatmul.mubr.f32.gmra.mrb[0].mxu0 %v99
    %v190 = vpop.f32.mrb[0].mxu0
    %v191 = vadd.f32 0.0, %v190
    %v192 = vpop.f32.mrb[0].mxu0
    %193 = vmatprep.mubr.f32.mxu0 0.0
    %194 = vmatmul.mubr.f32.gmra.mrb[0].mxu0 %v102
    %v195 = vpop.f32.mrb[0].mxu0
    %v196 = vadd.f32 0.0, %v195
    %v197 = vpop.f32.mrb[0].mxu0
    %198 = vmatprep.mubr.f32.mxu0 0.0
    %199 = vmatmul.mubr.f32.gmra.mrb[0].mxu0 %v105
    %v200 = vpop.f32.mrb[0].mxu0
    %v201 = vadd.f32 0.0, %v200
    %v202 = vpop.f32.mrb[0].mxu0
    %203 = vmatprep.mubr.f32.mxu0 0.0
    %204 = vmatmul.mubr.f32.gmra.mrb[0].mxu0 %v108
    %v205 = vpop.f32.mrb[0].mxu0
    %v206 = vadd.f32 0.0, %v205
    %v207 = vpop.f32.mrb[0].mxu0
    %208 = vmatprep.mubr.f32.mxu0 0.0
    %209 = vmatmul.mubr.f32.gmra.mrb[0].mxu0 %v111
    %v210 = vpop.f32.mrb[0].mxu0
    %v211 = vadd.f32 0.0, %v210
    %v212 = vpop.f32.mrb[0].mxu0
    %213 = vmatprep.mubr.f32.mxu0 0.0
    %214 = vmatmul.mubr.f32.gmra.mrb[0].mxu0 %v114
    %v215 = vpop.f32.mrb[0].mxu0
    %v216 = vadd.f32 0.0, %v215
    %v217 = vpop.f32.mrb[0].mxu0
    %218 = vmatprep.mubr.f32.mxu0 0.0
    %219 = vmatmul.mubr.f32.gmra.mrb[0].mxu0 %v117
    %v220 = vpop.f32.mrb[0].mxu0
    %v221 = vadd.f32 0.0, %v220
    %v222 = vpop.f32.mrb[0].mxu0
    %223 = vdwg.mxu0
    %v225 = vsel %vm94, %v84, 0
    %v228 = vsel %vm94, %v85, 0
    %v231 = vsel %vm94, %v86, 0
    %v234 = vsel %vm94, %v87, 0
    %v237 = vsel %vm94, %v88, 0
    %v240 = vsel %vm94, %v89, 0
    %v243 = vsel %vm94, %v90, 0
    %v246 = vsel %vm94, %v91, 0
    %248 = vmatprep.subr.mxu0 0.0
    %249 = vmatpush1.msra.mxu0 %v72
    %250 = vmatprep.subr.mxu0 0.0
    %251 = vmatpush1.msra.mxu0 %v73
    %252 = vmatprep.subr.mxu0 0.0
    %253 = vmatpush1.msra.mxu0 0.0
    %254 = vmatprep.subr.mxu0 0.0
    %255 = vmatpush1.msra.mxu0 0.0
    %256 = vmatprep.subr.mxu0 0.0
    %257 = vmatpush1.msra.mxu0 0.0
    %258 = vmatprep.subr.mxu0 0.0
    %259 = vmatpush1.msra.mxu0 0.0
    %260 = vmatprep.subr.mxu0 0.0
    %261 = vmatpush1.msra.mxu0 0.0
    %262 = vmatprep.subr.mxu0 0.0
    %263 = vmatpush1.msra.mxu0 0.0
    %264 = vmatprep.subr.mxu0 0.0
    %265 = vmatpush1.msra.mxu0 0.0
    %266 = vmatprep.subr.mxu0 0.0
    %267 = vmatpush1.msra.mxu0 0.0
    %268 = vmatprep.subr.mxu0 0.0
    %269 = vmatpush1.msra.mxu0 0.0
    %270 = vmatprep.subr.mxu0 0.0
    %271 = vmatpush1.msra.mxu0 0.0
    %272 = vmatprep.subr.mxu0 0.0
    %273 = vmatpush1.msra.mxu0 0.0
    %274 = vmatprep.subr.mxu0 0.0
    %275 = vmatpush1.msra.mxu0 0.0
    %276 = vmatprep.subr.mxu0 0.0
    %277 = vmatpush1.msra.mxu0 0.0
    %278 = vmatprep.subr.mxu0 0.0
    %279 = vmatpush1.msra.mxu0 0.0
    %280 = vmatprep.subr.mxu0 0.0
    %281 = vmatpush1.msra.mxu0 0.0
    %282 = vmatprep.subr.mxu0 0.0
    %283 = vmatpush1.msra.mxu0 0.0
    %284 = vmatprep.subr.mxu0 0.0
    %285 = vmatpush1.msra.mxu0 0.0
    %286 = vmatprep.subr.mxu0 0.0
    %287 = vmatpush1.msra.mxu0 0.0
    %288 = vmatprep.subr.mxu0 0.0
    %289 = vmatpush1.msra.mxu0 0.0
    %290 = vmatprep.subr.mxu0 0.0
    %291 = vmatpush1.msra.mxu0 0.0
    %292 = vmatprep.subr.mxu0 0.0
    %293 = vmatpush1.msra.mxu0 0.0
    %294 = vmatprep.subr.mxu0 0.0
    %295 = vmatpush1.msra.mxu0 0.0
    %296 = vmatprep.subr.mxu0 0.0
    %297 = vmatpush1.msra.mxu0 0.0
    %298 = vmatprep.subr.mxu0 0.0
    %299 = vmatpush1.msra.mxu0 0.0
    %300 = vmatprep.subr.mxu0 0.0
    %301 = vmatpush1.msra.mxu0 0.0
    %302 = vmatprep.subr.mxu0 0.0
    %303 = vmatpush1.msra.mxu0 0.0
    %304 = vmatprep.subr.mxu0 0.0
    %305 = vmatpush1.msra.mxu0 0.0
    %306 = vmatprep.subr.mxu0 0.0
    %307 = vmatpush1.msra.mxu0 0.0
    %308 = vmatprep.subr.mxu0 0.0
    %309 = vmatpush1.msra.mxu0 0.0
    %310 = vmatprep.subr.mxu0 0.0
    %311 = vmatpush1.msra.mxu0 0.0
    %312 = vmatprep.mubr.f32.mxu0 0.0
    %313 = vmatmul.mubr.f32.gmra.mrb[0].mxu0 %v225
    %v314 = vpop.f32.mrb[0].mxu0
    %v315 = vadd.f32 0.0, %v314
    %v316 = vpop.f32.mrb[0].mxu0
    %317 = vmatprep.mubr.f32.mxu0 0.0
    %318 = vmatmul.mubr.f32.gmra.mrb[0].mxu0 %v228
    %v319 = vpop.f32.mrb[0].mxu0
    %v320 = vadd.f32 0.0, %v319
    %v321 = vpop.f32.mrb[0].mxu0
    %322 = vmatprep.mubr.f32.mxu0 0.0
    %323 = vmatmul.mubr.f32.gmra.mrb[0].mxu0 %v231
    %v324 = vpop.f32.mrb[0].mxu0
    %v325 = vadd.f32 0.0, %v324
    %v326 = vpop.f32.mrb[0].mxu0
    %327 = vmatprep.mubr.f32.mxu0 0.0
    %328 = vmatmul.mubr.f32.gmra.mrb[0].mxu0 %v234
    %v329 = vpop.f32.mrb[0].mxu0
    %v330 = vadd.f32 0.0, %v329
    %v331 = vpop.f32.mrb[0].mxu0
    %332 = vmatprep.mubr.f32.mxu0 0.0
    %333 = vmatmul.mubr.f32.gmra.mrb[0].mxu0 %v237
    %v334 = vpop.f32.mrb[0].mxu0
    %v335 = vadd.f32 0.0, %v334
    %v336 = vpop.f32.mrb[0].mxu0
    %337 = vmatprep.mubr.f32.mxu0 0.0
    %338 = vmatmul.mubr.f32.gmra.mrb[0].mxu0 %v240
    %v339 = vpop.f32.mrb[0].mxu0
    %v340 = vadd.f32 0.0, %v339
    %v341 = vpop.f32.mrb[0].mxu0
    %342 = vmatprep.mubr.f32.mxu0 0.0
    %343 = vmatmul.mubr.f32.gmra.mrb[0].mxu0 %v243
    %v344 = vpop.f32.mrb[0].mxu0
    %v345 = vadd.f32 0.0, %v344
    %v346 = vpop.f32.mrb[0].mxu0
    %347 = vmatprep.mubr.f32.mxu0 0.0
    %348 = vmatmul.mubr.f32.gmra.mrb[0].mxu0 %v246
    %v349 = vpop.f32.mrb[0].mxu0
    %v350 = vadd.f32 0.0, %v349
    %v351 = vpop.f32.mrb[0].mxu0
    %352 = vdwg.mxu0
    %353 = vmatprep.subr.mxu0 0.0
    %354 = vmatpush1.msra.mxu0 %v74
    %355 = vmatprep.subr.mxu0 0.0
    %356 = vmatpush1.msra.mxu0 %v75
    %357 = vmatprep.subr.mxu0 0.0
    %358 = vmatpush1.msra.mxu0 0.0
    %359 = vmatprep.subr.mxu0 0.0
    %360 = vmatpush1.msra.mxu0 0.0
    %361 = vmatprep.subr.mxu0 0.0
    %362 = vmatpush1.msra.mxu0 0.0
    %363 = vmatprep.subr.mxu0 0.0
    %364 = vmatpush1.msra.mxu0 0.0
    %365 = vmatprep.subr.mxu0 0.0
    %366 = vmatpush1.msra.mxu0 0.0
    %367 = vmatprep.subr.mxu0 0.0
    %368 = vmatpush1.msra.mxu0 0.0
    %369 = vmatprep.subr.mxu0 0.0
    %370 = vmatpush1.msra.mxu0 0.0
    %371 = vmatprep.subr.mxu0 0.0
    %372 = vmatpush1.msra.mxu0 0.0
    %373 = vmatprep.subr.mxu0 0.0
    %374 = vmatpush1.msra.mxu0 0.0
    %375 = vmatprep.subr.mxu0 0.0
    %376 = vmatpush1.msra.mxu0 0.0
    %377 = vmatprep.subr.mxu0 0.0
    %378 = vmatpush1.msra.mxu0 0.0
    %379 = vmatprep.subr.mxu0 0.0
    %380 = vmatpush1.msra.mxu0 0.0
    %381 = vmatprep.subr.mxu0 0.0
    %382 = vmatpush1.msra.mxu0 0.0
    %383 = vmatprep.subr.mxu0 0.0
    %384 = vmatpush1.msra.mxu0 0.0
    %385 = vmatprep.subr.mxu0 0.0
    %386 = vmatpush1.msra.mxu0 0.0
    %387 = vmatprep.subr.mxu0 0.0
    %388 = vmatpush1.msra.mxu0 0.0
    %389 = vmatprep.subr.mxu0 0.0
    %390 = vmatpush1.msra.mxu0 0.0
    %391 = vmatprep.subr.mxu0 0.0
    %392 = vmatpush1.msra.mxu0 0.0
    %393 = vmatprep.subr.mxu0 0.0
    %394 = vmatpush1.msra.mxu0 0.0
    %395 = vmatprep.subr.mxu0 0.0
    %396 = vmatpush1.msra.mxu0 0.0
    %397 = vmatprep.subr.mxu0 0.0
    %398 = vmatpush1.msra.mxu0 0.0
    %399 = vmatprep.subr.mxu0 0.0
    %400 = vmatpush1.msra.mxu0 0.0
    %401 = vmatprep.subr.mxu0 0.0
    %402 = vmatpush1.msra.mxu0 0.0
    %403 = vmatprep.subr.mxu0 0.0
    %404 = vmatpush1.msra.mxu0 0.0
    %405 = vmatprep.subr.mxu0 0.0
    %406 = vmatpush1.msra.mxu0 0.0
    %407 = vmatprep.subr.mxu0 0.0
    %408 = vmatpush1.msra.mxu0 0.0
    %409 = vmatprep.subr.mxu0 0.0
    %410 = vmatpush1.msra.mxu0 0.0
    %411 = vmatprep.subr.mxu0 0.0
    %412 = vmatpush1.msra.mxu0 0.0
    %413 = vmatprep.subr.mxu0 0.0
    %414 = vmatpush1.msra.mxu0 0.0
    %415 = vmatprep.subr.mxu0 0.0
    %416 = vmatpush1.msra.mxu0 0.0
    %417 = vmatprep.mubr.f32.mxu0 0.0
    %418 = vmatmul.mubr.f32.gmra.mrb[0].mxu0 %v96
    %v419 = vpop.f32.mrb[0].mxu0
    %v420 = vadd.f32 0.0, %v419
    %v421 = vpop.f32.mrb[0].mxu0
    %422 = vmatprep.mubr.f32.mxu0 0.0
    %423 = vmatmul.mubr.f32.gmra.mrb[0].mxu0 %v99
    %v424 = vpop.f32.mrb[0].mxu0
    %v425 = vadd.f32 0.0, %v424
    %v426 = vpop.f32.mrb[0].mxu0
    %427 = vmatprep.mubr.f32.mxu0 0.0
    %428 = vmatmul.mubr.f32.gmra.mrb[0].mxu0 %v102
    %v429 = vpop.f32.mrb[0].mxu0
    %v430 = vadd.f32 0.0, %v429
    %v431 = vpop.f32.mrb[0].mxu0
    %432 = vmatprep.mubr.f32.mxu0 0.0
    %433 = vmatmul.mubr.f32.gmra.mrb[0].mxu0 %v105
    %v434 = vpop.f32.mrb[0].mxu0
    %v435 = vadd.f32 0.0, %v434
    %v436 = vpop.f32.mrb[0].mxu0
    %437 = vmatprep.mubr.f32.mxu0 0.0
    %438 = vmatmul.mubr.f32.gmra.mrb[0].mxu0 %v108
    %v439 = vpop.f32.mrb[0].mxu0
    %v440 = vadd.f32 0.0, %v439
    %v441 = vpop.f32.mrb[0].mxu0
    %442 = vmatprep.mubr.f32.mxu0 0.0
    %443 = vmatmul.mubr.f32.gmra.mrb[0].mxu0 %v111
    %v444 = vpop.f32.mrb[0].mxu0
    %v445 = vadd.f32 0.0, %v444
    %v446 = vpop.f32.mrb[0].mxu0
    %447 = vmatprep.mubr.f32.mxu0 0.0
    %448 = vmatmul.mubr.f32.gmra.mrb[0].mxu0 %v114
    %v449 = vpop.f32.mrb[0].mxu0
    %v450 = vadd.f32 0.0, %v449
    %v451 = vpop.f32.mrb[0].mxu0
    %452 = vmatprep.mubr.f32.mxu0 0.0
    %453 = vmatmul.mubr.f32.gmra.mrb[0].mxu0 %v117
    %v454 = vpop.f32.mrb[0].mxu0
    %v455 = vadd.f32 0.0, %v454
    %v456 = vpop.f32.mrb[0].mxu0
    %457 = vdwg.mxu0
    %458 = vmatprep.subr.mxu0 0.0
    %459 = vmatpush1.msra.mxu0 %v74
    %460 = vmatprep.subr.mxu0 0.0
    %461 = vmatpush1.msra.mxu0 %v75
    %462 = vmatprep.subr.mxu0 0.0
    %463 = vmatpush1.msra.mxu0 0.0
    %464 = vmatprep.subr.mxu0 0.0
    %465 = vmatpush1.msra.mxu0 0.0
    %466 = vmatprep.subr.mxu0 0.0
    %467 = vmatpush1.msra.mxu0 0.0
    %468 = vmatprep.subr.mxu0 0.0
    %469 = vmatpush1.msra.mxu0 0.0
    %470 = vmatprep.subr.mxu0 0.0
    %471 = vmatpush1.msra.mxu0 0.0
    %472 = vmatprep.subr.mxu0 0.0
    %473 = vmatpush1.msra.mxu0 0.0
    %474 = vmatprep.subr.mxu0 0.0
    %475 = vmatpush1.msra.mxu0 0.0
    %476 = vmatprep.subr.mxu0 0.0
    %477 = vmatpush1.msra.mxu0 0.0
    %478 = vmatprep.subr.mxu0 0.0
    %479 = vmatpush1.msra.mxu0 0.0
    %480 = vmatprep.subr.mxu0 0.0
    %481 = vmatpush1.msra.mxu0 0.0
    %482 = vmatprep.subr.mxu0 0.0
    %483 = vmatpush1.msra.mxu0 0.0
    %484 = vmatprep.subr.mxu0 0.0
    %485 = vmatpush1.msra.mxu0 0.0
    %486 = vmatprep.subr.mxu0 0.0
    %487 = vmatpush1.msra.mxu0 0.0
    %488 = vmatprep.subr.mxu0 0.0
    %489 = vmatpush1.msra.mxu0 0.0
    %490 = vmatprep.subr.mxu0 0.0
    %491 = vmatpush1.msra.mxu0 0.0
    %492 = vmatprep.subr.mxu0 0.0
    %493 = vmatpush1.msra.mxu0 0.0
    %494 = vmatprep.subr.mxu0 0.0
    %495 = vmatpush1.msra.mxu0 0.0
    %496 = vmatprep.subr.mxu0 0.0
    %497 = vmatpush1.msra.mxu0 0.0
    %498 = vmatprep.subr.mxu0 0.0
    %499 = vmatpush1.msra.mxu0 0.0
    %500 = vmatprep.subr.mxu0 0.0
    %501 = vmatpush1.msra.mxu0 0.0
    %502 = vmatprep.subr.mxu0 0.0
    %503 = vmatpush1.msra.mxu0 0.0
    %504 = vmatprep.subr.mxu0 0.0
    %505 = vmatpush1.msra.mxu0 0.0
    %506 = vmatprep.subr.mxu0 0.0
    %507 = vmatpush1.msra.mxu0 0.0
    %508 = vmatprep.subr.mxu0 0.0
    %509 = vmatpush1.msra.mxu0 0.0
    %510 = vmatprep.subr.mxu0 0.0
    %511 = vmatpush1.msra.mxu0 0.0
    %512 = vmatprep.subr.mxu0 0.0
    %513 = vmatpush1.msra.mxu0 0.0
    %514 = vmatprep.subr.mxu0 0.0
    %515 = vmatpush1.msra.mxu0 0.0
    %516 = vmatprep.subr.mxu0 0.0
    %517 = vmatpush1.msra.mxu0 0.0
    %518 = vmatprep.subr.mxu0 0.0
    %519 = vmatpush1.msra.mxu0 0.0
    %520 = vmatprep.subr.mxu0 0.0
    %521 = vmatpush1.msra.mxu0 0.0
    %522 = vmatprep.mubr.f32.mxu0 0.0
    %523 = vmatmul.mubr.f32.gmra.mrb[0].mxu0 %v225
    %v524 = vpop.f32.mrb[0].mxu0
    %v525 = vadd.f32 0.0, %v524
    %v526 = vpop.f32.mrb[0].mxu0
    %527 = vmatprep.mubr.f32.mxu0 0.0
    %528 = vmatmul.mubr.f32.gmra.mrb[0].mxu0 %v228
    %v529 = vpop.f32.mrb[0].mxu0
    %v530 = vadd.f32 0.0, %v529
    %v531 = vpop.f32.mrb[0].mxu0
    %532 = vmatprep.mubr.f32.mxu0 0.0
    %533 = vmatmul.mubr.f32.gmra.mrb[0].mxu0 %v231
    %v534 = vpop.f32.mrb[0].mxu0
    %v535 = vadd.f32 0.0, %v534
    %v536 = vpop.f32.mrb[0].mxu0
    %537 = vmatprep.mubr.f32.mxu0 0.0
    %538 = vmatmul.mubr.f32.gmra.mrb[0].mxu0 %v234
    %v539 = vpop.f32.mrb[0].mxu0
    %v540 = vadd.f32 0.0, %v539
    %v541 = vpop.f32.mrb[0].mxu0
    %542 = vmatprep.mubr.f32.mxu0 0.0
    %543 = vmatmul.mubr.f32.gmra.mrb[0].mxu0 %v237
    %v544 = vpop.f32.mrb[0].mxu0
    %v545 = vadd.f32 0.0, %v544
    %v546 = vpop.f32.mrb[0].mxu0
    %547 = vmatprep.mubr.f32.mxu0 0.0
    %548 = vmatmul.mubr.f32.gmra.mrb[0].mxu0 %v240
    %v549 = vpop.f32.mrb[0].mxu0
    %v550 = vadd.f32 0.0, %v549
    %v551 = vpop.f32.mrb[0].mxu0
    %552 = vmatprep.mubr.f32.mxu0 0.0
    %553 = vmatmul.mubr.f32.gmra.mrb[0].mxu0 %v243
    %v554 = vpop.f32.mrb[0].mxu0
    %v555 = vadd.f32 0.0, %v554
    %v556 = vpop.f32.mrb[0].mxu0
    %557 = vmatprep.mubr.f32.mxu0 0.0
    %558 = vmatmul.mubr.f32.gmra.mrb[0].mxu0 %v246
    %v559 = vpop.f32.mrb[0].mxu0
    %v560 = vadd.f32 0.0, %v559
    %v561 = vpop.f32.mrb[0].mxu0
    %562 = vdwg.mxu0
    %v563 = vsub.f32 %v420, %v525
    %v564 = vsub.f32 %v425, %v530
    %v565 = vsub.f32 %v430, %v535
    %v566 = vsub.f32 %v435, %v540
    %v567 = vsub.f32 %v440, %v545
    %v568 = vsub.f32 %v445, %v550
    %v569 = vsub.f32 %v450, %v555
    %v570 = vsub.f32 %v455, %v560
    %v571 = vmul.f32 %v563, %v563
    %v572 = vmul.f32 %v564, %v564
    %v573 = vmul.f32 %v565, %v565
    %v574 = vmul.f32 %v566, %v566
    %v575 = vmul.f32 %v567, %v567
    %v576 = vmul.f32 %v568, %v568
    %v577 = vmul.f32 %v569, %v569
    %v578 = vmul.f32 %v570, %v570
    %vm579 = vcmask 23552
    %v580 = vsel %vm579, %v571, 0.0
    %581 = vadd.xlane.f32.xlu0 %v580
    %v582 = vpop.xlane.xlu0 %581
    %v583 = vsel %vm579, %v572, 0.0
    %584 = vadd.xlane.f32.xlu0 %v583
    %v585 = vpop.xlane.xlu0 %584
    %v586 = vsel %vm579, %v573, 0.0
    %587 = vadd.xlane.f32.xlu0 %v586
    %v588 = vpop.xlane.xlu0 %587
    %v589 = vsel %vm579, %v574, 0.0
    %590 = vadd.xlane.f32.xlu0 %v589
    %v591 = vpop.xlane.xlu0 %590
    %v592 = vsel %vm579, %v575, 0.0
    %593 = vadd.xlane.f32.xlu0 %v592
    %v594 = vpop.xlane.xlu0 %593
    %v595 = vsel %vm579, %v576, 0.0
    %596 = vadd.xlane.f32.xlu0 %v595
    %v597 = vpop.xlane.xlu0 %596
    %v598 = vsel %vm579, %v577, 0.0
    %599 = vadd.xlane.f32.xlu0 %v598
    %v600 = vpop.xlane.xlu0 %599
    %v601 = vsel %vm579, %v578, 0.0
    %602 = vadd.xlane.f32.xlu0 %v601
    %v603 = vpop.xlane.xlu0 %602
    %v604 = vpack.c.bf16 %v191, %v186
    %v605 = vpack.c.bf16 %v201, %v196
    %v606 = vpack.c.bf16 %v211, %v206
    %v607 = vpack.c.bf16 %v221, %v216
    %v608 = vld [vmem:[%s6] sm:$0xff]
    %v609 = vld [vmem:[%s6 + $0x8] sm:$0xff]
    %v610 = vld [vmem:[%s6 + $0x10] sm:$0xff]
    %v611 = vld [vmem:[%s6 + $0x18] sm:$0xff]
    %v612 = vpack.c.bf16 %v609, %v608
    %v613 = vpack.c.bf16 %v611, %v610
    %v614 = vpack.c.bf16 %v320, %v315
    %v615 = vpack.c.bf16 %v330, %v325
    %v616 = vpack.c.bf16 %v340, %v335
    %v617 = vpack.c.bf16 %v350, %v345
    %v618 = vld [vmem:[%s7] sm:$0xff]
    %v619 = vld [vmem:[%s7 + $0x8] sm:$0xff]
    %v620 = vld [vmem:[%s7 + $0x10] sm:$0xff]
    %v621 = vld [vmem:[%s7 + $0x18] sm:$0xff]
    %v622 = vpack.c.bf16 %v619, %v618
    %v623 = vpack.c.bf16 %v621, %v620
    %vm624 = vcmask 261120
    %v626 = vsel %vm624, %v614, 0
    %v629 = vsel %vm624, %v615, 0
    %v632 = vsel %vm624, %v616, 0
    %v635 = vsel %vm624, %v617, 0
    %637 = vmatprep.subr.bf16.mxu0 0
    %638 = vmatpush1.bf16.msra.mxu0 %v622
    %639 = vmatprep.subr.bf16.mxu0 0
    %640 = vmatpush1.bf16.msra.mxu0 %v623
    %641 = vmatprep.subr.bf16.mxu0 0
    %642 = vmatpush1.bf16.msra.mxu0 0
    %643 = vmatprep.subr.bf16.mxu0 0
    %644 = vmatpush1.bf16.msra.mxu0 0
    %645 = vmatprep.subr.bf16.mxu0 0
    %646 = vmatpush1.bf16.msra.mxu0 0
    %647 = vmatprep.subr.bf16.mxu0 0
    %648 = vmatpush1.bf16.msra.mxu0 0
    %649 = vmatprep.subr.bf16.mxu0 0
    %650 = vmatpush1.bf16.msra.mxu0 0
    %651 = vmatprep.subr.bf16.mxu0 0
    %652 = vmatpush1.bf16.msra.mxu0 0
    %653 = vmatprep.subr.bf16.mxu0 0
    %654 = vmatpush1.bf16.msra.mxu0 0
    %655 = vmatprep.subr.bf16.mxu0 0
    %656 = vmatpush1.bf16.msra.mxu0 0
    %657 = vmatprep.subr.bf16.mxu0 0
    %658 = vmatpush1.bf16.msra.mxu0 0
    %659 = vmatprep.subr.bf16.mxu0 0
    %660 = vmatpush1.bf16.msra.mxu0 0
    %661 = vmatprep.subr.bf16.mxu0 0
    %662 = vmatpush1.bf16.msra.mxu0 0
    %663 = vmatprep.subr.bf16.mxu0 0
    %664 = vmatpush1.bf16.msra.mxu0 0
    %665 = vmatprep.subr.bf16.mxu0 0
    %666 = vmatpush1.bf16.msra.mxu0 0
    %667 = vmatprep.subr.bf16.mxu0 0
    %668 = vmatpush1.bf16.msra.mxu0 0
    %669 = vmatprep.mubr.bf16.mxu0 0
    %670 = vmatmul.mubr.bf16.gmra.mrb[0].mxu0 %v626
    %v671 = vpop.f32.mrb[0].mxu0
    %v672 = vadd.f32 0.0, %v671
    %v673 = vpop.f32.mrb[0].mxu0
    %v674 = vpop.f32.mrb[0].mxu0
    %v675 = vadd.f32 0.0, %v674
    %v676 = vpop.f32.mrb[0].mxu0
    %677 = vmatprep.mubr.bf16.mxu0 0
    %678 = vmatmul.mubr.bf16.gmra.mrb[0].mxu0 %v629
    %v679 = vpop.f32.mrb[0].mxu0
    %v680 = vadd.f32 0.0, %v679
    %v681 = vpop.f32.mrb[0].mxu0
    %v682 = vpop.f32.mrb[0].mxu0
    %v683 = vadd.f32 0.0, %v682
    %v684 = vpop.f32.mrb[0].mxu0
    %685 = vmatprep.mubr.bf16.mxu0 0
    %686 = vmatmul.mubr.bf16.gmra.mrb[0].mxu0 %v632
    %v687 = vpop.f32.mrb[0].mxu0
    %v688 = vadd.f32 0.0, %v687
    %v689 = vpop.f32.mrb[0].mxu0
    %v690 = vpop.f32.mrb[0].mxu0
    %v691 = vadd.f32 0.0, %v690
    %v692 = vpop.f32.mrb[0].mxu0
    %693 = vmatprep.mubr.bf16.mxu0 0
    %694 = vmatmul.mubr.bf16.gmra.mrb[0].mxu0 %v635
    %v695 = vpop.f32.mrb[0].mxu0
    %v696 = vadd.f32 0.0, %v695
    %v697 = vpop.f32.mrb[0].mxu0
    %v698 = vpop.f32.mrb[0].mxu0
    %v699 = vadd.f32 0.0, %v698
    %v700 = vpop.f32.mrb[0].mxu0
    %701 = vdwg.mxu0
    %v703 = vsel %vm624, %v604, 0
    %v706 = vsel %vm624, %v605, 0
    %v709 = vsel %vm624, %v606, 0
    %v712 = vsel %vm624, %v607, 0
    %714 = vmatprep.subr.bf16.mxu0 0
    %715 = vmatpush1.bf16.msra.mxu0 %v612
    %716 = vmatprep.subr.bf16.mxu0 0
    %717 = vmatpush1.bf16.msra.mxu0 %v613
    %718 = vmatprep.subr.bf16.mxu0 0
    %719 = vmatpush1.bf16.msra.mxu0 0
    %720 = vmatprep.subr.bf16.mxu0 0
    %721 = vmatpush1.bf16.msra.mxu0 0
    %722 = vmatprep.subr.bf16.mxu0 0
    %723 = vmatpush1.bf16.msra.mxu0 0
    %724 = vmatprep.subr.bf16.mxu0 0
    %725 = vmatpush1.bf16.msra.mxu0 0
    %726 = vmatprep.subr.bf16.mxu0 0
    %727 = vmatpush1.bf16.msra.mxu0 0
    %728 = vmatprep.subr.bf16.mxu0 0
    %729 = vmatpush1.bf16.msra.mxu0 0
    %730 = vmatprep.subr.bf16.mxu0 0
    %731 = vmatpush1.bf16.msra.mxu0 0
    %732 = vmatprep.subr.bf16.mxu0 0
    %733 = vmatpush1.bf16.msra.mxu0 0
    %734 = vmatprep.subr.bf16.mxu0 0
    %735 = vmatpush1.bf16.msra.mxu0 0
    %736 = vmatprep.subr.bf16.mxu0 0
    %737 = vmatpush1.bf16.msra.mxu0 0
    %738 = vmatprep.subr.bf16.mxu0 0
    %739 = vmatpush1.bf16.msra.mxu0 0
    %740 = vmatprep.subr.bf16.mxu0 0
    %741 = vmatpush1.bf16.msra.mxu0 0
    %742 = vmatprep.subr.bf16.mxu0 0
    %743 = vmatpush1.bf16.msra.mxu0 0
    %744 = vmatprep.subr.bf16.mxu0 0
    %745 = vmatpush1.bf16.msra.mxu0 0
    %746 = vmatprep.mubr.bf16.mxu0 0
    %747 = vmatmul.mubr.bf16.gmra.mrb[0].mxu0 %v703
    %v748 = vpop.f32.mrb[0].mxu0
    %v749 = vadd.f32 %v672, %v748
    %v750 = vpop.f32.mrb[0].mxu0
    %v751 = vpop.f32.mrb[0].mxu0
    %v752 = vadd.f32 %v675, %v751
    %v753 = vpop.f32.mrb[0].mxu0
    %754 = vmatprep.mubr.bf16.mxu0 0
    %755 = vmatmul.mubr.bf16.gmra.mrb[0].mxu0 %v706
    %v756 = vpop.f32.mrb[0].mxu0
    %v757 = vadd.f32 %v680, %v756
    %v758 = vpop.f32.mrb[0].mxu0
    %v759 = vpop.f32.mrb[0].mxu0
    %v760 = vadd.f32 %v683, %v759
    %v761 = vpop.f32.mrb[0].mxu0
    %762 = vmatprep.mubr.bf16.mxu0 0
    %763 = vmatmul.mubr.bf16.gmra.mrb[0].mxu0 %v709
    %v764 = vpop.f32.mrb[0].mxu0
    %v765 = vadd.f32 %v688, %v764
    %v766 = vpop.f32.mrb[0].mxu0
    %v767 = vpop.f32.mrb[0].mxu0
    %v768 = vadd.f32 %v691, %v767
    %v769 = vpop.f32.mrb[0].mxu0
    %770 = vmatprep.mubr.bf16.mxu0 0
    %771 = vmatmul.mubr.bf16.gmra.mrb[0].mxu0 %v712
    %v772 = vpop.f32.mrb[0].mxu0
    %v773 = vadd.f32 %v696, %v772
    %v774 = vpop.f32.mrb[0].mxu0
    %v775 = vpop.f32.mrb[0].mxu0
    %v776 = vadd.f32 %v699, %v775
    %v777 = vpop.f32.mrb[0].mxu0
    %778 = vdwg.mxu0
    %v779 = vld [vmem:[%s2] sm:$0xff]
    %v780 = vld [vmem:[%s2 + $0x8] sm:$0xff]
    %v781 = vld [vmem:[%s2 + $0x10] sm:$0xff]
    %v782 = vld [vmem:[%s2 + $0x18] sm:$0xff]
    %v783 = vld [vmem:[%s2 + $0x20] sm:$0xff]
    %v784 = vld [vmem:[%s2 + $0x28] sm:$0xff]
    %v785 = vld [vmem:[%s2 + $0x30] sm:$0xff]
    %v786 = vld [vmem:[%s2 + $0x38] sm:$0xff]
    %v787 = vpack.c.bf16 %v780, %v779
    %v788 = vpack.c.bf16 %v782, %v781
    %v789 = vpack.c.bf16 %v784, %v783
    %v790 = vpack.c.bf16 %v786, %v785
    %v791 = vld [vmem:[%s9] sm:$0xff]
    %v792 = vpack.c.bf16 %v791, %v791
    %vm793 = vcmask 64512
    %v795 = vsel %vm793, %v787, 0
    %v798 = vsel %vm793, %v788, 0
    %v801 = vsel %vm793, %v789, 0
    %v804 = vsel %vm793, %v790, 0
    %vm806 = vcmask 1043456
    %v808 = vsel %vm806, %v792, 0
    %810 = vmatprep.subr.bf16.mxu0 0
    %811 = vmatpush1.bf16.msra.mxu0 %v808
    %812 = vmatprep.subr.bf16.mxu0 0
    %813 = vmatpush1.bf16.msra.mxu0 0
    %814 = vmatprep.subr.bf16.mxu0 0
    %815 = vmatpush1.bf16.msra.mxu0 0
    %816 = vmatprep.subr.bf16.mxu0 0
    %817 = vmatpush1.bf16.msra.mxu0 0
    %818 = vmatprep.subr.bf16.mxu0 0
    %819 = vmatpush1.bf16.msra.mxu0 0
    %820 = vmatprep.subr.bf16.mxu0 0
    %821 = vmatpush1.bf16.msra.mxu0 0
    %822 = vmatprep.subr.bf16.mxu0 0
    %823 = vmatpush1.bf16.msra.mxu0 0
    %824 = vmatprep.subr.bf16.mxu0 0
    %825 = vmatpush1.bf16.msra.mxu0 0
    %826 = vmatprep.subr.bf16.mxu0 0
    %827 = vmatpush1.bf16.msra.mxu0 0
    %828 = vmatprep.subr.bf16.mxu0 0
    %829 = vmatpush1.bf16.msra.mxu0 0
    %830 = vmatprep.subr.bf16.mxu0 0
    %831 = vmatpush1.bf16.msra.mxu0 0
    %832 = vmatprep.subr.bf16.mxu0 0
    %833 = vmatpush1.bf16.msra.mxu0 0
    %834 = vmatprep.subr.bf16.mxu0 0
    %835 = vmatpush1.bf16.msra.mxu0 0
    %836 = vmatprep.subr.bf16.mxu0 0
    %837 = vmatpush1.bf16.msra.mxu0 0
    %838 = vmatprep.subr.bf16.mxu0 0
    %839 = vmatpush1.bf16.msra.mxu0 0
    %840 = vmatprep.subr.bf16.mxu0 0
    %841 = vmatpush1.bf16.msra.mxu0 0
    %842 = vmatprep.mubr.bf16.mxu0 0
    %843 = vmatmul.mubr.bf16.gmra.mrb[0].mxu0 %v795
    %v844 = vpop.f32.mrb[0].mxu0
    %v845 = vadd.f32 0.0, %v844
    %v846 = vpop.f32.mrb[0].mxu0
    %v847 = vpop.f32.mrb[0].mxu0
    %v848 = vadd.f32 0.0, %v847
    %v849 = vpop.f32.mrb[0].mxu0
    %850 = vmatprep.mubr.bf16.mxu0 0
    %851 = vmatmul.mubr.bf16.gmra.mrb[0].mxu0 %v798
    %v852 = vpop.f32.mrb[0].mxu0
    %v853 = vadd.f32 0.0, %v852
    %v854 = vpop.f32.mrb[0].mxu0
    %v855 = vpop.f32.mrb[0].mxu0
    %v856 = vadd.f32 0.0, %v855
    %v857 = vpop.f32.mrb[0].mxu0
    %858 = vmatprep.mubr.bf16.mxu0 0
    %859 = vmatmul.mubr.bf16.gmra.mrb[0].mxu0 %v801
    %v860 = vpop.f32.mrb[0].mxu0
    %v861 = vadd.f32 0.0, %v860
    %v862 = vpop.f32.mrb[0].mxu0
    %v863 = vpop.f32.mrb[0].mxu0
    %v864 = vadd.f32 0.0, %v863
    %v865 = vpop.f32.mrb[0].mxu0
    %866 = vmatprep.mubr.bf16.mxu0 0
    %867 = vmatmul.mubr.bf16.gmra.mrb[0].mxu0 %v804
    %v868 = vpop.f32.mrb[0].mxu0
    %v869 = vadd.f32 0.0, %v868
    %v870 = vpop.f32.mrb[0].mxu0
    %v871 = vpop.f32.mrb[0].mxu0
    %v872 = vadd.f32 0.0, %v871
    %v873 = vpop.f32.mrb[0].mxu0
    %874 = vdwg.mxu0
    %v875 = vadd.f32 %v749, %v845
    %v876 = vadd.f32 %v752, %v848
    %v877 = vadd.f32 %v757, %v853
    %v878 = vadd.f32 %v760, %v856
    %v879 = vadd.f32 %v765, %v861
    %v880 = vadd.f32 %v768, %v864
    %v881 = vadd.f32 %v773, %v869
    %v882 = vadd.f32 %v776, %v872
    %v883 = vld [vmem:[%s8] sm:$0x1]
    %v885 = vlaneseq
    %v886 = vshrl.u32 %v885, 7
    %v887 = vsub.s32 0, %v886
    %v888 = vrot.slane %v883, %v887
    %v890 = vmul.f32 %v582, %v888
    %v891 = vmul.f32 %v585, %v888
    %v892 = vmul.f32 %v588, %v888
    %v893 = vmul.f32 %v591, %v888
    %v894 = vmul.f32 %v594, %v888
    %v895 = vmul.f32 %v597, %v888
    %v896 = vmul.f32 %v600, %v888
    %v897 = vmul.f32 %v603, %v888
    %v898 = vadd.f32 %v875, %v890
    %v899 = vadd.f32 %v876, %v891
    %v900 = vadd.f32 %v877, %v892
    %v901 = vadd.f32 %v878, %v893
    %v902 = vadd.f32 %v879, %v894
    %v903 = vadd.f32 %v880, %v895
    %v904 = vadd.f32 %v881, %v896
    %v905 = vadd.f32 %v882, %v897
    %v906 = vld [vmem:[%s10] sm:$0x1]
    %v908 = vlaneseq
    %v909 = vshrl.u32 %v908, 7
    %v910 = vsub.s32 0, %v909
    %v911 = vrot.slane %v906, %v910
    %v913 = vadd.f32 %v898, %v911
    %v914 = vadd.f32 %v899, %v911
    %v915 = vadd.f32 %v900, %v911
    %v916 = vadd.f32 %v901, %v911
    %v917 = vadd.f32 %v902, %v911
    %v918 = vadd.f32 %v903, %v911
    %v919 = vadd.f32 %v904, %v911
    %v920 = vadd.f32 %v905, %v911
    %v921 = vxor.u32 %v913, 2147483648
    %v922 = vxor.u32 %v914, 2147483648
    %v923 = vxor.u32 %v915, 2147483648
    %v924 = vxor.u32 %v916, 2147483648
    %v925 = vxor.u32 %v917, 2147483648
    %v926 = vxor.u32 %v918, 2147483648
    %v927 = vxor.u32 %v919, 2147483648
    %v928 = vxor.u32 %v920, 2147483648
    %v929 = vmul.f32 %v921, 1.442695
    %v930 = vpow.pop %v929
    %v931 = vmul.f32 %v922, 1.442695
    %v932 = vpow.pop %v931
    %v933 = vmul.f32 %v923, 1.442695
    %v934 = vpow.pop %v933
    %v935 = vmul.f32 %v924, 1.442695
    %v936 = vpow.pop %v935
    %v937 = vmul.f32 %v925, 1.442695
    %v938 = vpow.pop %v937
    %v939 = vmul.f32 %v926, 1.442695
    %v940 = vpow.pop %v939
    %v941 = vmul.f32 %v927, 1.442695
    %v942 = vpow.pop %v941
    %v943 = vmul.f32 %v928, 1.442695
    %v944 = vpow.pop %v943
    %v945 = vadd.f32 %v930, 1.0
    %v946 = vadd.f32 %v932, 1.0
    %v947 = vadd.f32 %v934, 1.0
    %v948 = vadd.f32 %v936, 1.0
    %v949 = vadd.f32 %v938, 1.0
    %v950 = vadd.f32 %v940, 1.0
    %v951 = vadd.f32 %v942, 1.0
    %v952 = vadd.f32 %v944, 1.0
    %v953 = vrcp.pop %v945
    %v954 = vmul.f32 1.0, %v953
    %v955 = vrcp.pop %v946
    %v956 = vmul.f32 1.0, %v955
    %v957 = vrcp.pop %v947
    %v958 = vmul.f32 1.0, %v957
    %v959 = vrcp.pop %v948
    %v960 = vmul.f32 1.0, %v959
    %v961 = vrcp.pop %v949
    %v962 = vmul.f32 1.0, %v961
    %v963 = vrcp.pop %v950
    %v964 = vmul.f32 1.0, %v963
    %v965 = vrcp.pop %v951
    %v966 = vmul.f32 1.0, %v965
    %v967 = vrcp.pop %v952
    %v968 = vmul.f32 1.0, %v967
    %v969 = vmul.f32 %v913, %v954
    %v970 = vmul.f32 %v914, %v956
    %v971 = vmul.f32 %v915, %v958
    %v972 = vmul.f32 %v916, %v960
    %v973 = vmul.f32 %v917, %v962
    %v974 = vmul.f32 %v918, %v964
    %v975 = vmul.f32 %v919, %v966
    %v976 = vmul.f32 %v920, %v968
    %v977 = vpack.c.bf16 %v970, %v969
    %v978 = vpack.c.bf16 %v972, %v971
    %v979 = vpack.c.bf16 %v974, %v973
    %v980 = vpack.c.bf16 %v976, %v975
    %v981 = vld [vmem:[%s11] sm:$0xff]
    %v982 = vld [vmem:[%s11 + $0x8] sm:$0xff]
    %v983 = vld [vmem:[%s11 + $0x10] sm:$0xff]
    %v984 = vld [vmem:[%s11 + $0x18] sm:$0xff]
    %v985 = vpack.c.bf16 %v982, %v981
    %v986 = vpack.c.bf16 %v984, %v983
    %v987 = vld [vmem:[%s12] sm:$0x1]
    %v989 = vlaneseq
    %v990 = vshrl.u32 %v989, 7
    %v991 = vsub.s32 0, %v990
    %v992 = vrot.slane %v987, %v991
    %v995 = vsel %vm624, %v977, 0
    %v998 = vsel %vm624, %v978, 0
    %v1001 = vsel %vm624, %v979, 0
    %v1004 = vsel %vm624, %v980, 0
    %1006 = vmatprep.subr.bf16.mxu0 0
    %1007 = vmatpush1.bf16.msra.mxu0 %v985
    %1008 = vmatprep.subr.bf16.mxu0 0
    %1009 = vmatpush1.bf16.msra.mxu0 %v986
    %1010 = vmatprep.subr.bf16.mxu0 0
    %1011 = vmatpush1.bf16.msra.mxu0 0
    %1012 = vmatprep.subr.bf16.mxu0 0
    %1013 = vmatpush1.bf16.msra.mxu0 0
    %1014 = vmatprep.subr.bf16.mxu0 0
    %1015 = vmatpush1.bf16.msra.mxu0 0
    %1016 = vmatprep.subr.bf16.mxu0 0
    %1017 = vmatpush1.bf16.msra.mxu0 0
    %1018 = vmatprep.subr.bf16.mxu0 0
    %1019 = vmatpush1.bf16.msra.mxu0 0
    %1020 = vmatprep.subr.bf16.mxu0 0
    %1021 = vmatpush1.bf16.msra.mxu0 0
    %1022 = vmatprep.subr.bf16.mxu0 0
    %1023 = vmatpush1.bf16.msra.mxu0 0
    %1024 = vmatprep.subr.bf16.mxu0 0
    %1025 = vmatpush1.bf16.msra.mxu0 0
    %1026 = vmatprep.subr.bf16.mxu0 0
    %1027 = vmatpush1.bf16.msra.mxu0 0
    %1028 = vmatprep.subr.bf16.mxu0 0
    %1029 = vmatpush1.bf16.msra.mxu0 0
    %1030 = vmatprep.subr.bf16.mxu0 0
    %1031 = vmatpush1.bf16.msra.mxu0 0
    %1032 = vmatprep.subr.bf16.mxu0 0
    %1033 = vmatpush1.bf16.msra.mxu0 0
    %1034 = vmatprep.subr.bf16.mxu0 0
    %1035 = vmatpush1.bf16.msra.mxu0 0
    %1036 = vmatprep.subr.bf16.mxu0 0
    %1037 = vmatpush1.bf16.msra.mxu0 0
    %1038 = vmatprep.mubr.bf16.mxu0 0
    %1039 = vmatmul.mubr.bf16.gmra.mrb[0].mxu0 %v995
    %v1040 = vpop.f32.mrb[0].mxu0
    %v1041 = vadd.f32 %v992, %v1040
    %v1042 = vpop.f32.mrb[0].mxu0
    %v1043 = vpop.f32.mrb[0].mxu0
    %v1044 = vadd.f32 %v992, %v1043
    %v1045 = vpop.f32.mrb[0].mxu0
    %1046 = vmatprep.mubr.bf16.mxu0 0
    %1047 = vmatmul.mubr.bf16.gmra.mrb[0].mxu0 %v998
    %v1048 = vpop.f32.mrb[0].mxu0
    %v1049 = vadd.f32 %v992, %v1048
    %v1050 = vpop.f32.mrb[0].mxu0
    %v1051 = vpop.f32.mrb[0].mxu0
    %v1052 = vadd.f32 %v992, %v1051
    %v1053 = vpop.f32.mrb[0].mxu0
    %1054 = vmatprep.mubr.bf16.mxu0 0
    %1055 = vmatmul.mubr.bf16.gmra.mrb[0].mxu0 %v1001
    %v1056 = vpop.f32.mrb[0].mxu0
    %v1057 = vadd.f32 %v992, %v1056
    %v1058 = vpop.f32.mrb[0].mxu0
    %v1059 = vpop.f32.mrb[0].mxu0
    %v1060 = vadd.f32 %v992, %v1059
    %v1061 = vpop.f32.mrb[0].mxu0
    %1062 = vmatprep.mubr.bf16.mxu0 0
    %1063 = vmatmul.mubr.bf16.gmra.mrb[0].mxu0 %v1004
    %v1064 = vpop.f32.mrb[0].mxu0
    %v1065 = vadd.f32 %v992, %v1064
    %v1066 = vpop.f32.mrb[0].mxu0
    %v1067 = vpop.f32.mrb[0].mxu0
    %v1068 = vadd.f32 %v992, %v1067
    %v1069 = vpop.f32.mrb[0].mxu0
    %1070 = vdwg.mxu0
    %v1071 = vxor.u32 %v1041, 2147483648
    %v1072 = vxor.u32 %v1044, 2147483648
    %v1073 = vxor.u32 %v1049, 2147483648
    %v1074 = vxor.u32 %v1052, 2147483648
    %v1075 = vxor.u32 %v1057, 2147483648
    %v1076 = vxor.u32 %v1060, 2147483648
    %v1077 = vxor.u32 %v1065, 2147483648
    %v1078 = vxor.u32 %v1068, 2147483648
    %v1079 = vmul.f32 %v1071, 1.442695
    %v1080 = vpow.pop %v1079
    %v1081 = vmul.f32 %v1072, 1.442695
    %v1082 = vpow.pop %v1081
    %v1083 = vmul.f32 %v1073, 1.442695
    %v1084 = vpow.pop %v1083
    %v1085 = vmul.f32 %v1074, 1.442695
    %v1086 = vpow.pop %v1085
    %v1087 = vmul.f32 %v1075, 1.442695
    %v1088 = vpow.pop %v1087
    %v1089 = vmul.f32 %v1076, 1.442695
    %v1090 = vpow.pop %v1089
    %v1091 = vmul.f32 %v1077, 1.442695
    %v1092 = vpow.pop %v1091
    %v1093 = vmul.f32 %v1078, 1.442695
    %v1094 = vpow.pop %v1093
    %v1095 = vadd.f32 %v1080, 1.0
    %v1096 = vadd.f32 %v1082, 1.0
    %v1097 = vadd.f32 %v1084, 1.0
    %v1098 = vadd.f32 %v1086, 1.0
    %v1099 = vadd.f32 %v1088, 1.0
    %v1100 = vadd.f32 %v1090, 1.0
    %v1101 = vadd.f32 %v1092, 1.0
    %v1102 = vadd.f32 %v1094, 1.0
    %v1103 = vrcp.pop %v1095
    %v1104 = vmul.f32 1.0, %v1103
    %v1105 = vrcp.pop %v1096
    %v1106 = vmul.f32 1.0, %v1105
    %v1107 = vrcp.pop %v1097
    %v1108 = vmul.f32 1.0, %v1107
    %v1109 = vrcp.pop %v1098
    %v1110 = vmul.f32 1.0, %v1109
    %v1111 = vrcp.pop %v1099
    %v1112 = vmul.f32 1.0, %v1111
    %v1113 = vrcp.pop %v1100
    %v1114 = vmul.f32 1.0, %v1113
    %v1115 = vrcp.pop %v1101
    %v1116 = vmul.f32 1.0, %v1115
    %v1117 = vrcp.pop %v1102
    %v1118 = vmul.f32 1.0, %v1117
    %v1119 = vmul.f32 %v1041, %v1104
    %v1120 = vmul.f32 %v1044, %v1106
    %v1121 = vmul.f32 %v1049, %v1108
    %v1122 = vmul.f32 %v1052, %v1110
    %v1123 = vmul.f32 %v1057, %v1112
    %v1124 = vmul.f32 %v1060, %v1114
    %v1125 = vmul.f32 %v1065, %v1116
    %v1126 = vmul.f32 %v1068, %v1118
    %v1127 = vpack.c.bf16 %v1120, %v1119
    %v1128 = vpack.c.bf16 %v1122, %v1121
    %v1129 = vpack.c.bf16 %v1124, %v1123
    %v1130 = vpack.c.bf16 %v1126, %v1125
    %v1131 = vld [vmem:[%s13] sm:$0xff]
    %v1132 = vld [vmem:[%s13 + $0x8] sm:$0xff]
    %v1133 = vld [vmem:[%s13 + $0x10] sm:$0xff]
    %v1134 = vld [vmem:[%s13 + $0x18] sm:$0xff]
    %v1135 = vpack.c.bf16 %v1132, %v1131
    %v1136 = vpack.c.bf16 %v1134, %v1133
    %v1137 = vld [vmem:[%s14] sm:$0x1]
    %v1139 = vlaneseq
    %v1140 = vshrl.u32 %v1139, 7
    %v1141 = vsub.s32 0, %v1140
    %v1142 = vrot.slane %v1137, %v1141
    %v1145 = vsel %vm624, %v1127, 0
    %v1148 = vsel %vm624, %v1128, 0
    %v1151 = vsel %vm624, %v1129, 0
    %v1154 = vsel %vm624, %v1130, 0
    %1156 = vmatprep.subr.bf16.mxu0 0
    %1157 = vmatpush1.bf16.msra.mxu0 %v1135
    %1158 = vmatprep.subr.bf16.mxu0 0
    %1159 = vmatpush1.bf16.msra.mxu0 %v1136
    %1160 = vmatprep.subr.bf16.mxu0 0
    %1161 = vmatpush1.bf16.msra.mxu0 0
    %1162 = vmatprep.subr.bf16.mxu0 0
    %1163 = vmatpush1.bf16.msra.mxu0 0
    %1164 = vmatprep.subr.bf16.mxu0 0
    %1165 = vmatpush1.bf16.msra.mxu0 0
    %1166 = vmatprep.subr.bf16.mxu0 0
    %1167 = vmatpush1.bf16.msra.mxu0 0
    %1168 = vmatprep.subr.bf16.mxu0 0
    %1169 = vmatpush1.bf16.msra.mxu0 0
    %1170 = vmatprep.subr.bf16.mxu0 0
    %1171 = vmatpush1.bf16.msra.mxu0 0
    %1172 = vmatprep.subr.bf16.mxu0 0
    %1173 = vmatpush1.bf16.msra.mxu0 0
    %1174 = vmatprep.subr.bf16.mxu0 0
    %1175 = vmatpush1.bf16.msra.mxu0 0
    %1176 = vmatprep.subr.bf16.mxu0 0
    %1177 = vmatpush1.bf16.msra.mxu0 0
    %1178 = vmatprep.subr.bf16.mxu0 0
    %1179 = vmatpush1.bf16.msra.mxu0 0
    %1180 = vmatprep.subr.bf16.mxu0 0
    %1181 = vmatpush1.bf16.msra.mxu0 0
    %1182 = vmatprep.subr.bf16.mxu0 0
    %1183 = vmatpush1.bf16.msra.mxu0 0
    %1184 = vmatprep.subr.bf16.mxu0 0
    %1185 = vmatpush1.bf16.msra.mxu0 0
    %1186 = vmatprep.subr.bf16.mxu0 0
    %1187 = vmatpush1.bf16.msra.mxu0 0
    %1188 = vmatprep.mubr.bf16.mxu0 0
    %1189 = vmatmul.mubr.bf16.gmra.mrb[0].mxu0 %v1145
    %v1190 = vpop.f32.mrb[0].mxu0
    %v1191 = vadd.f32 %v1142, %v1190
    %v1192 = vpop.f32.mrb[0].mxu0
    %v1193 = vpop.f32.mrb[0].mxu0
    %v1194 = vadd.f32 %v1142, %v1193
    %v1195 = vpop.f32.mrb[0].mxu0
    %1196 = vmatprep.mubr.bf16.mxu0 0
    %1197 = vmatmul.mubr.bf16.gmra.mrb[0].mxu0 %v1148
    %v1198 = vpop.f32.mrb[0].mxu0
    %v1199 = vadd.f32 %v1142, %v1198
    %v1200 = vpop.f32.mrb[0].mxu0
    %v1201 = vpop.f32.mrb[0].mxu0
    %v1202 = vadd.f32 %v1142, %v1201
    %v1203 = vpop.f32.mrb[0].mxu0
    %1204 = vmatprep.mubr.bf16.mxu0 0
    %1205 = vmatmul.mubr.bf16.gmra.mrb[0].mxu0 %v1151
    %v1206 = vpop.f32.mrb[0].mxu0
    %v1207 = vadd.f32 %v1142, %v1206
    %v1208 = vpop.f32.mrb[0].mxu0
    %v1209 = vpop.f32.mrb[0].mxu0
    %v1210 = vadd.f32 %v1142, %v1209
    %v1211 = vpop.f32.mrb[0].mxu0
    %1212 = vmatprep.mubr.bf16.mxu0 0
    %1213 = vmatmul.mubr.bf16.gmra.mrb[0].mxu0 %v1154
    %v1214 = vpop.f32.mrb[0].mxu0
    %v1215 = vadd.f32 %v1142, %v1214
    %v1216 = vpop.f32.mrb[0].mxu0
    %v1217 = vpop.f32.mrb[0].mxu0
    %v1218 = vadd.f32 %v1142, %v1217
    %v1219 = vpop.f32.mrb[0].mxu0
    %1220 = vdwg.mxu0
    %v1221 = vxor.u32 %v1191, 2147483648
    %v1222 = vxor.u32 %v1194, 2147483648
    %v1223 = vxor.u32 %v1199, 2147483648
    %v1224 = vxor.u32 %v1202, 2147483648
    %v1225 = vxor.u32 %v1207, 2147483648
    %v1226 = vxor.u32 %v1210, 2147483648
    %v1227 = vxor.u32 %v1215, 2147483648
    %v1228 = vxor.u32 %v1218, 2147483648
    %v1229 = vmul.f32 %v1221, 1.442695
    %v1230 = vpow.pop %v1229
    %v1231 = vmul.f32 %v1222, 1.442695
    %v1232 = vpow.pop %v1231
    %v1233 = vmul.f32 %v1223, 1.442695
    %v1234 = vpow.pop %v1233
    %v1235 = vmul.f32 %v1224, 1.442695
    %v1236 = vpow.pop %v1235
    %v1237 = vmul.f32 %v1225, 1.442695
    %v1238 = vpow.pop %v1237
    %v1239 = vmul.f32 %v1226, 1.442695
    %v1240 = vpow.pop %v1239
    %v1241 = vmul.f32 %v1227, 1.442695
    %v1242 = vpow.pop %v1241
    %v1243 = vmul.f32 %v1228, 1.442695
    %v1244 = vpow.pop %v1243
    %v1245 = vadd.f32 %v1230, 1.0
    %v1246 = vadd.f32 %v1232, 1.0
    %v1247 = vadd.f32 %v1234, 1.0
    %v1248 = vadd.f32 %v1236, 1.0
    %v1249 = vadd.f32 %v1238, 1.0
    %v1250 = vadd.f32 %v1240, 1.0
    %v1251 = vadd.f32 %v1242, 1.0
    %v1252 = vadd.f32 %v1244, 1.0
    %v1253 = vrcp.pop %v1245
    %v1254 = vmul.f32 1.0, %v1253
    %v1255 = vrcp.pop %v1246
    %v1256 = vmul.f32 1.0, %v1255
    %v1257 = vrcp.pop %v1247
    %v1258 = vmul.f32 1.0, %v1257
    %v1259 = vrcp.pop %v1248
    %v1260 = vmul.f32 1.0, %v1259
    %v1261 = vrcp.pop %v1249
    %v1262 = vmul.f32 1.0, %v1261
    %v1263 = vrcp.pop %v1250
    %v1264 = vmul.f32 1.0, %v1263
    %v1265 = vrcp.pop %v1251
    %v1266 = vmul.f32 1.0, %v1265
    %v1267 = vrcp.pop %v1252
    %v1268 = vmul.f32 1.0, %v1267
    %v1269 = vmul.f32 %v1191, %v1254
    %v1270 = vmul.f32 %v1194, %v1256
    %v1271 = vmul.f32 %v1199, %v1258
    %v1272 = vmul.f32 %v1202, %v1260
    %v1273 = vmul.f32 %v1207, %v1262
    %v1274 = vmul.f32 %v1210, %v1264
    %v1275 = vmul.f32 %v1215, %v1266
    %v1276 = vmul.f32 %v1218, %v1268
    %v1277 = vld [vmem:[%s15] sm:$0x1]
    %v1279 = vlaneseq
    %v1280 = vshrl.u32 %v1279, 7
    %v1281 = vsub.s32 0, %v1280
    %v1282 = vrot.slane %v1277, %v1281
    %v1284 = vmul.f32 %v1269, %v1282
    %v1285 = vmul.f32 %v1270, %v1282
    %v1286 = vmul.f32 %v1271, %v1282
    %v1287 = vmul.f32 %v1272, %v1282
    %v1288 = vmul.f32 %v1273, %v1282
    %v1289 = vmul.f32 %v1274, %v1282
    %v1290 = vmul.f32 %v1275, %v1282
    %v1291 = vmul.f32 %v1276, %v1282
    %v1292 = vsel %vm624, %v1284, 0.0
    %1293 = vadd.xlane.f32.xlu0 %v1292
    %v1294 = vpop.xlane.xlu0 %1293
    %v1295 = vsel %vm624, %v1285, 0.0
    %1296 = vadd.xlane.f32.xlu0 %v1295
    %v1297 = vpop.xlane.xlu0 %1296
    %v1298 = vsel %vm624, %v1286, 0.0
    %1299 = vadd.xlane.f32.xlu0 %v1298
    %v1300 = vpop.xlane.xlu0 %1299
    %v1301 = vsel %vm624, %v1287, 0.0
    %1302 = vadd.xlane.f32.xlu0 %v1301
    %v1303 = vpop.xlane.xlu0 %1302
    %v1304 = vsel %vm624, %v1288, 0.0
    %1305 = vadd.xlane.f32.xlu0 %v1304
    %v1306 = vpop.xlane.xlu0 %1305
    %v1307 = vsel %vm624, %v1289, 0.0
    %1308 = vadd.xlane.f32.xlu0 %v1307
    %v1309 = vpop.xlane.xlu0 %1308
    %v1310 = vsel %vm624, %v1290, 0.0
    %1311 = vadd.xlane.f32.xlu0 %v1310
    %v1312 = vpop.xlane.xlu0 %1311
    %v1313 = vsel %vm624, %v1291, 0.0
    %1314 = vadd.xlane.f32.xlu0 %v1313
    %v1315 = vpop.xlane.xlu0 %1314
    %v1316 = vmul.f32 %v563, %v1294
    %v1317 = vmul.f32 %v564, %v1297
    %v1318 = vmul.f32 %v565, %v1300
    %v1319 = vmul.f32 %v566, %v1303
    %v1320 = vmul.f32 %v567, %v1306
    %v1321 = vmul.f32 %v568, %v1309
    %v1322 = vmul.f32 %v569, %v1312
    %v1323 = vmul.f32 %v570, %v1315
    %vm1324 = vcmask 523264
    %v1326 = vsel %vm1324, %v92, 0
    %v1329 = vsel %vm1324, %v93, 0
    %1331 = vmatprep.subr.mxu0 0.0
    %1332 = vmatpush1.msra.mxu0 %v1316
    %1333 = vmatprep.subr.mxu0 0.0
    %1334 = vmatpush1.msra.mxu0 %v1317
    %1335 = vmatprep.subr.mxu0 0.0
    %1336 = vmatpush1.msra.mxu0 %v1318
    %1337 = vmatprep.subr.mxu0 0.0
    %1338 = vmatpush1.msra.mxu0 %v1319
    %1339 = vmatprep.subr.mxu0 0.0
    %1340 = vmatpush1.msra.mxu0 %v1320
    %1341 = vmatprep.subr.mxu0 0.0
    %1342 = vmatpush1.msra.mxu0 %v1321
    %1343 = vmatprep.subr.mxu0 0.0
    %1344 = vmatpush1.msra.mxu0 %v1322
    %1345 = vmatprep.subr.mxu0 0.0
    %1346 = vmatpush1.msra.mxu0 %v1323
    %1347 = vmatprep.subr.mxu0 0.0
    %1348 = vmatpush1.msra.mxu0 0.0
    %1349 = vmatprep.subr.mxu0 0.0
    %1350 = vmatpush1.msra.mxu0 0.0
    %1351 = vmatprep.subr.mxu0 0.0
    %1352 = vmatpush1.msra.mxu0 0.0
    %1353 = vmatprep.subr.mxu0 0.0
    %1354 = vmatpush1.msra.mxu0 0.0
    %1355 = vmatprep.subr.mxu0 0.0
    %1356 = vmatpush1.msra.mxu0 0.0
    %1357 = vmatprep.subr.mxu0 0.0
    %1358 = vmatpush1.msra.mxu0 0.0
    %1359 = vmatprep.subr.mxu0 0.0
    %1360 = vmatpush1.msra.mxu0 0.0
    %1361 = vmatprep.subr.mxu0 0.0
    %1362 = vmatpush1.msra.mxu0 0.0
    %1363 = vmatprep.subr.mxu0 0.0
    %1364 = vmatpush1.msra.mxu0 0.0
    %1365 = vmatprep.subr.mxu0 0.0
    %1366 = vmatpush1.msra.mxu0 0.0
    %1367 = vmatprep.subr.mxu0 0.0
    %1368 = vmatpush1.msra.mxu0 0.0
    %1369 = vmatprep.subr.mxu0 0.0
    %1370 = vmatpush1.msra.mxu0 0.0
    %1371 = vmatprep.subr.mxu0 0.0
    %1372 = vmatpush1.msra.mxu0 0.0
    %1373 = vmatprep.subr.mxu0 0.0
    %1374 = vmatpush1.msra.mxu0 0.0
    %1375 = vmatprep.subr.mxu0 0.0
    %1376 = vmatpush1.msra.mxu0 0.0
    %1377 = vmatprep.subr.mxu0 0.0
    %1378 = vmatpush1.msra.mxu0 0.0
    %1379 = vmatprep.subr.mxu0 0.0
    %1380 = vmatpush1.msra.mxu0 0.0
    %1381 = vmatprep.subr.mxu0 0.0
    %1382 = vmatpush1.msra.mxu0 0.0
    %1383 = vmatprep.subr.mxu0 0.0
    %1384 = vmatpush1.msra.mxu0 0.0
    %1385 = vmatprep.subr.mxu0 0.0
    %1386 = vmatpush1.msra.mxu0 0.0
    %1387 = vmatprep.subr.mxu0 0.0
    %1388 = vmatpush1.msra.mxu0 0.0
    %1389 = vmatprep.subr.mxu0 0.0
    %1390 = vmatpush1.msra.mxu0 0.0
    %1391 = vmatprep.subr.mxu0 0.0
    %1392 = vmatpush1.msra.mxu0 0.0
    %1393 = vmatprep.subr.mxu0 0.0
    %1394 = vmatpush1.msra.mxu0 0.0
    %1395 = vmatprep.mubr.f32.mxu0 0.0
    %1396 = vmatmul.mubr.f32.gmra.mrb[0].mxu0 %v1326
    %v1397 = vpop.f32.mrb[0].mxu0
    %v1398 = vadd.f32 0.0, %v1397
    %v1399 = vpop.f32.mrb[0].mxu0
    %1400 = vmatprep.mubr.f32.mxu0 0.0
    %1401 = vmatmul.mubr.f32.gmra.mrb[0].mxu0 %v1329
    %v1402 = vpop.f32.mrb[0].mxu0
    %v1403 = vadd.f32 0.0, %v1402
    %v1404 = vpop.f32.mrb[0].mxu0
    %1405 = vdwg.mxu0
    %v1406 = vsel %vm1324, %v92, 0.0
    %1407 = vadd.xlane.f32.xlu0 %v1406
    %v1408 = vpop.xlane.xlu0 %1407
    %v1409 = vsel %vm1324, %v93, 0.0
    %1410 = vadd.xlane.f32.xlu0 %v1409
    %v1411 = vpop.xlane.xlu0 %1410
    %v1412 = vmax.f32 %v1408, 1.0
    %v1413 = vmax.f32 %v1411, 1.0
    %v1414 = vrcp.pop %v1412
    %v1415 = vrcp.pop %v1413
    %v1416 = vmul.f32 %v1398, %v1414
    %v1417 = vmul.f32 %v1403, %v1415
    %v1418 = vadd.f32 %v74, %v1416
    %v1419 = vadd.f32 %v75, %v1417
    %1420 = vst.msk [vmem:[%s22] sm:$0xff] %vm579, %v1418
    %1421 = vst.msk [vmem:[%s22 + $0x8] sm:$0xff] %vm579, %v1419
    %1422 = vmatprep.subr.mxu0 0.0
    %1423 = vmatpush1.msra.mxu0 %v1119
    %1424 = vmatprep.subr.mxu0 0.0
    %1425 = vmatpush1.msra.mxu0 %v1120
    %1426 = vmatprep.subr.mxu0 0.0
    %1427 = vmatpush1.msra.mxu0 %v1121
    %1428 = vmatprep.subr.mxu0 0.0
    %1429 = vmatpush1.msra.mxu0 %v1122
    %1430 = vmatprep.subr.mxu0 0.0
    %1431 = vmatpush1.msra.mxu0 %v1123
    %1432 = vmatprep.subr.mxu0 0.0
    %1433 = vmatpush1.msra.mxu0 %v1124
    %1434 = vmatprep.subr.mxu0 0.0
    %1435 = vmatpush1.msra.mxu0 %v1125
    %1436 = vmatprep.subr.mxu0 0.0
    %1437 = vmatpush1.msra.mxu0 %v1126
    %1438 = vmatprep.subr.mxu0 0.0
    %1439 = vmatpush1.msra.mxu0 0.0
    %1440 = vmatprep.subr.mxu0 0.0
    %1441 = vmatpush1.msra.mxu0 0.0
    %1442 = vmatprep.subr.mxu0 0.0
    %1443 = vmatpush1.msra.mxu0 0.0
    %1444 = vmatprep.subr.mxu0 0.0
    %1445 = vmatpush1.msra.mxu0 0.0
    %1446 = vmatprep.subr.mxu0 0.0
    %1447 = vmatpush1.msra.mxu0 0.0
    %1448 = vmatprep.subr.mxu0 0.0
    %1449 = vmatpush1.msra.mxu0 0.0
    %1450 = vmatprep.subr.mxu0 0.0
    %1451 = vmatpush1.msra.mxu0 0.0
    %1452 = vmatprep.subr.mxu0 0.0
    %1453 = vmatpush1.msra.mxu0 0.0
    %1454 = vmatprep.subr.mxu0 0.0
    %1455 = vmatpush1.msra.mxu0 0.0
    %1456 = vmatprep.subr.mxu0 0.0
    %1457 = vmatpush1.msra.mxu0 0.0
    %1458 = vmatprep.subr.mxu0 0.0
    %1459 = vmatpush1.msra.mxu0 0.0
    %1460 = vmatprep.subr.mxu0 0.0
    %1461 = vmatpush1.msra.mxu0 0.0
    %1462 = vmatprep.subr.mxu0 0.0
    %1463 = vmatpush1.msra.mxu0 0.0
    %1464 = vmatprep.subr.mxu0 0.0
    %1465 = vmatpush1.msra.mxu0 0.0
    %1466 = vmatprep.subr.mxu0 0.0
    %1467 = vmatpush1.msra.mxu0 0.0
    %1468 = vmatprep.subr.mxu0 0.0
    %1469 = vmatpush1.msra.mxu0 0.0
    %1470 = vmatprep.subr.mxu0 0.0
    %1471 = vmatpush1.msra.mxu0 0.0
    %1472 = vmatprep.subr.mxu0 0.0
    %1473 = vmatpush1.msra.mxu0 0.0
    %1474 = vmatprep.subr.mxu0 0.0
    %1475 = vmatpush1.msra.mxu0 0.0
    %1476 = vmatprep.subr.mxu0 0.0
    %1477 = vmatpush1.msra.mxu0 0.0
    %1478 = vmatprep.subr.mxu0 0.0
    %1479 = vmatpush1.msra.mxu0 0.0
    %1480 = vmatprep.subr.mxu0 0.0
    %1481 = vmatpush1.msra.mxu0 0.0
    %1482 = vmatprep.subr.mxu0 0.0
    %1483 = vmatpush1.msra.mxu0 0.0
    %1484 = vmatprep.subr.mxu0 0.0
    %1485 = vmatpush1.msra.mxu0 0.0
    %1486 = vmatprep.mubr.f32.mxu0 0.0
    %1487 = vmatmul.mubr.f32.gmra.mrb[0].mxu0 %v1326
    %v1488 = vpop.f32.mrb[0].mxu0
    %v1489 = vadd.f32 0.0, %v1488
    %v1490 = vpop.f32.mrb[0].mxu0
    %1491 = vmatprep.mubr.f32.mxu0 0.0
    %1492 = vmatmul.mubr.f32.gmra.mrb[0].mxu0 %v1329
    %v1493 = vpop.f32.mrb[0].mxu0
    %v1494 = vadd.f32 0.0, %v1493
    %v1495 = vpop.f32.mrb[0].mxu0
    %1496 = vdwg.mxu0
    %v1497 = vpack.c.bf16 %v73, %v72
    %v1498 = vld [vmem:[%s16] sm:$0xff]
    %v1499 = vld [vmem:[%s16 + $0x8] sm:$0xff]
    %v1500 = vld [vmem:[%s16 + $0x10] sm:$0xff]
    %v1501 = vld [vmem:[%s16 + $0x18] sm:$0xff]
    %v1502 = vpack.c.bf16 %v1499, %v1498
    %v1503 = vpack.c.bf16 %v1501, %v1500
    %v1504 = vpack.c.bf16 %v1494, %v1489
    %v1505 = vld [vmem:[%s17] sm:$0xff]
    %v1506 = vld [vmem:[%s17 + $0x8] sm:$0xff]
    %v1507 = vld [vmem:[%s17 + $0x10] sm:$0xff]
    %v1508 = vld [vmem:[%s17 + $0x18] sm:$0xff]
    %v1509 = vpack.c.bf16 %v1506, %v1505
    %v1510 = vpack.c.bf16 %v1508, %v1507
    %v1512 = vsel %vm624, %v1504, 0
    %1514 = vmatprep.subr.bf16.mxu0 0
    %1515 = vmatpush1.bf16.msra.mxu0 %v1509
    %1516 = vmatprep.subr.bf16.mxu0 0
    %1517 = vmatpush1.bf16.msra.mxu0 %v1510
    %1518 = vmatprep.subr.bf16.mxu0 0
    %1519 = vmatpush1.bf16.msra.mxu0 0
    %1520 = vmatprep.subr.bf16.mxu0 0
    %1521 = vmatpush1.bf16.msra.mxu0 0
    %1522 = vmatprep.subr.bf16.mxu0 0
    %1523 = vmatpush1.bf16.msra.mxu0 0
    %1524 = vmatprep.subr.bf16.mxu0 0
    %1525 = vmatpush1.bf16.msra.mxu0 0
    %1526 = vmatprep.subr.bf16.mxu0 0
    %1527 = vmatpush1.bf16.msra.mxu0 0
    %1528 = vmatprep.subr.bf16.mxu0 0
    %1529 = vmatpush1.bf16.msra.mxu0 0
    %1530 = vmatprep.subr.bf16.mxu0 0
    %1531 = vmatpush1.bf16.msra.mxu0 0
    %1532 = vmatprep.subr.bf16.mxu0 0
    %1533 = vmatpush1.bf16.msra.mxu0 0
    %1534 = vmatprep.subr.bf16.mxu0 0
    %1535 = vmatpush1.bf16.msra.mxu0 0
    %1536 = vmatprep.subr.bf16.mxu0 0
    %1537 = vmatpush1.bf16.msra.mxu0 0
    %1538 = vmatprep.subr.bf16.mxu0 0
    %1539 = vmatpush1.bf16.msra.mxu0 0
    %1540 = vmatprep.subr.bf16.mxu0 0
    %1541 = vmatpush1.bf16.msra.mxu0 0
    %1542 = vmatprep.subr.bf16.mxu0 0
    %1543 = vmatpush1.bf16.msra.mxu0 0
    %1544 = vmatprep.subr.bf16.mxu0 0
    %1545 = vmatpush1.bf16.msra.mxu0 0
    %1546 = vmatprep.mubr.bf16.mxu0 0
    %1547 = vmatmul.mubr.bf16.gmra.mrb[0].mxu0 %v1512
    %v1548 = vpop.f32.mrb[0].mxu0
    %v1549 = vadd.f32 0.0, %v1548
    %v1550 = vpop.f32.mrb[0].mxu0
    %v1551 = vpop.f32.mrb[0].mxu0
    %v1552 = vadd.f32 0.0, %v1551
    %v1553 = vpop.f32.mrb[0].mxu0
    %1554 = vdwg.mxu0
    %v1556 = vsel %vm624, %v1497, 0
    %1558 = vmatprep.subr.bf16.mxu0 0
    %1559 = vmatpush1.bf16.msra.mxu0 %v1502
    %1560 = vmatprep.subr.bf16.mxu0 0
    %1561 = vmatpush1.bf16.msra.mxu0 %v1503
    %1562 = vmatprep.subr.bf16.mxu0 0
    %1563 = vmatpush1.bf16.msra.mxu0 0
    %1564 = vmatprep.subr.bf16.mxu0 0
    %1565 = vmatpush1.bf16.msra.mxu0 0
    %1566 = vmatprep.subr.bf16.mxu0 0
    %1567 = vmatpush1.bf16.msra.mxu0 0
    %1568 = vmatprep.subr.bf16.mxu0 0
    %1569 = vmatpush1.bf16.msra.mxu0 0
    %1570 = vmatprep.subr.bf16.mxu0 0
    %1571 = vmatpush1.bf16.msra.mxu0 0
    %1572 = vmatprep.subr.bf16.mxu0 0
    %1573 = vmatpush1.bf16.msra.mxu0 0
    %1574 = vmatprep.subr.bf16.mxu0 0
    %1575 = vmatpush1.bf16.msra.mxu0 0
    %1576 = vmatprep.subr.bf16.mxu0 0
    %1577 = vmatpush1.bf16.msra.mxu0 0
    %1578 = vmatprep.subr.bf16.mxu0 0
    %1579 = vmatpush1.bf16.msra.mxu0 0
    %1580 = vmatprep.subr.bf16.mxu0 0
    %1581 = vmatpush1.bf16.msra.mxu0 0
    %1582 = vmatprep.subr.bf16.mxu0 0
    %1583 = vmatpush1.bf16.msra.mxu0 0
    %1584 = vmatprep.subr.bf16.mxu0 0
    %1585 = vmatpush1.bf16.msra.mxu0 0
    %1586 = vmatprep.subr.bf16.mxu0 0
    %1587 = vmatpush1.bf16.msra.mxu0 0
    %1588 = vmatprep.subr.bf16.mxu0 0
    %1589 = vmatpush1.bf16.msra.mxu0 0
    %1590 = vmatprep.mubr.bf16.mxu0 0
    %1591 = vmatmul.mubr.bf16.gmra.mrb[0].mxu0 %v1556
    %v1592 = vpop.f32.mrb[0].mxu0
    %v1593 = vadd.f32 %v1549, %v1592
    %v1594 = vpop.f32.mrb[0].mxu0
    %v1595 = vpop.f32.mrb[0].mxu0
    %v1596 = vadd.f32 %v1552, %v1595
    %v1597 = vpop.f32.mrb[0].mxu0
    %1598 = vdwg.mxu0
    %v1599 = vld [vmem:[%s18] sm:$0x1]
    %v1601 = vlaneseq
    %v1602 = vshrl.u32 %v1601, 7
    %v1603 = vsub.s32 0, %v1602
    %v1604 = vrot.slane %v1599, %v1603
    %v1606 = vadd.f32 %v1593, %v1604
    %v1607 = vadd.f32 %v1596, %v1604
    %v1608 = vxor.u32 %v1606, 2147483648
    %v1609 = vxor.u32 %v1607, 2147483648
    %v1610 = vmul.f32 %v1608, 1.442695
    %v1611 = vpow.pop %v1610
    %v1612 = vmul.f32 %v1609, 1.442695
    %v1613 = vpow.pop %v1612
    %v1614 = vadd.f32 %v1611, 1.0
    %v1615 = vadd.f32 %v1613, 1.0
    %v1616 = vrcp.pop %v1614
    %v1617 = vmul.f32 1.0, %v1616
    %v1618 = vrcp.pop %v1615
    %v1619 = vmul.f32 1.0, %v1618
    %v1620 = vmul.f32 %v1606, %v1617
    %v1621 = vmul.f32 %v1607, %v1619
    %v1622 = vpack.c.bf16 %v1621, %v1620
    %v1623 = vld [vmem:[%s19] sm:$0xff]
    %v1624 = vld [vmem:[%s19 + $0x8] sm:$0xff]
    %v1625 = vld [vmem:[%s19 + $0x10] sm:$0xff]
    %v1626 = vld [vmem:[%s19 + $0x18] sm:$0xff]
    %v1627 = vpack.c.bf16 %v1624, %v1623
    %v1628 = vpack.c.bf16 %v1626, %v1625
    %v1630 = vsel %vm624, %v1622, 0
    %1632 = vmatprep.subr.bf16.mxu0 0
    %1633 = vmatpush1.bf16.msra.mxu0 %v1627
    %1634 = vmatprep.subr.bf16.mxu0 0
    %1635 = vmatpush1.bf16.msra.mxu0 %v1628
    %1636 = vmatprep.subr.bf16.mxu0 0
    %1637 = vmatpush1.bf16.msra.mxu0 0
    %1638 = vmatprep.subr.bf16.mxu0 0
    %1639 = vmatpush1.bf16.msra.mxu0 0
    %1640 = vmatprep.subr.bf16.mxu0 0
    %1641 = vmatpush1.bf16.msra.mxu0 0
    %1642 = vmatprep.subr.bf16.mxu0 0
    %1643 = vmatpush1.bf16.msra.mxu0 0
    %1644 = vmatprep.subr.bf16.mxu0 0
    %1645 = vmatpush1.bf16.msra.mxu0 0
    %1646 = vmatprep.subr.bf16.mxu0 0
    %1647 = vmatpush1.bf16.msra.mxu0 0
    %1648 = vmatprep.subr.bf16.mxu0 0
    %1649 = vmatpush1.bf16.msra.mxu0 0
    %1650 = vmatprep.subr.bf16.mxu0 0
    %1651 = vmatpush1.bf16.msra.mxu0 0
    %1652 = vmatprep.subr.bf16.mxu0 0
    %1653 = vmatpush1.bf16.msra.mxu0 0
    %1654 = vmatprep.subr.bf16.mxu0 0
    %1655 = vmatpush1.bf16.msra.mxu0 0
    %1656 = vmatprep.subr.bf16.mxu0 0
    %1657 = vmatpush1.bf16.msra.mxu0 0
    %1658 = vmatprep.subr.bf16.mxu0 0
    %1659 = vmatpush1.bf16.msra.mxu0 0
    %1660 = vmatprep.subr.bf16.mxu0 0
    %1661 = vmatpush1.bf16.msra.mxu0 0
    %1662 = vmatprep.subr.bf16.mxu0 0
    %1663 = vmatpush1.bf16.msra.mxu0 0
    %1664 = vmatprep.mubr.bf16.mxu0 0
    %1665 = vmatmul.mubr.bf16.gmra.mrb[0].mxu0 %v1630
    %v1666 = vpop.f32.mrb[0].mxu0
    %v1667 = vadd.f32 0.0, %v1666
    %v1668 = vpop.f32.mrb[0].mxu0
    %v1669 = vpop.f32.mrb[0].mxu0
    %v1670 = vadd.f32 0.0, %v1669
    %v1671 = vpop.f32.mrb[0].mxu0
    %1672 = vdwg.mxu0
    %v1673 = vadd.f32 %v72, %v1667
    %v1674 = vadd.f32 %v73, %v1670
    %v1675 = vld [vmem:[%s20] sm:$0x1]
    %v1677 = vlaneseq
    %v1678 = vshrl.u32 %v1677, 7
    %v1679 = vsub.s32 0, %v1678
    %v1680 = vrot.slane %v1675, %v1679
    %v1682 = vadd.f32 %v1673, %v1680
    %v1683 = vadd.f32 %v1674, %v1680
    %1684 = vst.msk [vmem:[#allocation2] sm:$0xff] %vm624, %v1682
    %1685 = vst.msk [vmem:[#allocation2 + $0x8] sm:$0xff] %vm624, %v1683
    // Predicated region
    $region86: #{egcl_forward.1} parent=1 // pred_check
      _
    $region87: #{egcl_forward.1} parent=1 // pred_check_branch
      %1687 = sbr.rel (0) target = $region89
    $region88: #{egcl_forward.1} parent=1 // pred_region
      %s1689 = ssub.s32 256, 256
      %1690 = vsyncadd [#allocation3], %s1689
      %s1691 = sshll.u32 [#allocation2], 4
      %s1692 = int_to_ptr.vmem [resolvable:$true] %s1691
      %1697 = dma.vmem_to_hbm [thread:$0]  %s1692, 256, %s21, [#allocation3], 128, 128, 8
    $region89: #{egcl_forward.1} parent=1 // pred_fallthru
      _
    // Predicated region
    $region90: #{egcl_forward.1} parent=1 // pred_check
      _
    $region91: #{egcl_forward.1} parent=1 // pred_check_branch
      %1699 = sbr.rel (0) target = $region93
    $region92: #{egcl_forward.1} parent=1 // pred_region
      _
    $region93: #{egcl_forward.1} parent=1 // pred_fallthru
      _
    // Predicated region
    $region94: #{egcl_forward.1} parent=1 // pred_check
      _
    $region95: #{egcl_forward.1} parent=1 // pred_check_branch
      %1701 = sbr.rel (0) target = $region97
    $region96: #{egcl_forward.1} parent=1 // pred_region
      %1702 = dma.done [#allocation3], 256
    $region97: #{egcl_forward.1} parent=1 // pred_fallthru
      _
    // Predicated region
    $region98: #{egcl_forward.1} parent=1 // pred_check
      _
    $region99: #{egcl_forward.1} parent=1 // pred_check_branch
      %1704 = sbr.rel (0) target = $region101
    $region100: #{egcl_forward.1} parent=1 // pred_region
      _
    $region101: #{egcl_forward.1} parent=1 // pred_fallthru
      _
    %1705 = vsyncpa [#allocation3], 1

</llo_original>
